<compile_context>
chip_gen: v6e
topology: v6e:2x2x1
jax: 0.10.0
libtpu: 0.0.40
codegen_flags: <defaults>
</compile_context>

<pallas_src>
import functools

import numpy as np
import jax
import jax.numpy as jnp
from jax.experimental import pallas as pl
from jax.experimental.pallas import tpu as pltpu


EXPANSION = 4
BN_EPS = 1e-5


# ---------------------------------------------------------------------------
# device / tiling / compiler-param helpers
# ---------------------------------------------------------------------------
_VMEM_CAP = None
_BUFFERED_OK = None


def _vmem_cap():
    """~85% of physical VMEM (headroom for relayouts); 54 MiB fallback."""
    global _VMEM_CAP
    if _VMEM_CAP is None:
        cap = None
        try:
            info = pltpu.get_tpu_info()
            cap = getattr(info, "vmem_capacity_bytes", None)
        except Exception:
            cap = None
        phys = int(cap) if cap else (64 << 20)
        _VMEM_CAP = int(phys * 0.85)
    return _VMEM_CAP


def _compiler_params(dims, est_bytes):
    limit = int(min(max(int(est_bytes * 1.25) + (4 << 20), 32 << 20), _vmem_cap()))
    return pltpu.CompilerParams(dimension_semantics=dims,
                                vmem_limit_bytes=limit)


def _buffered_supported():
    """Probe once whether pipeline_mode=pl.Buffered(1) works in this env."""
    global _BUFFERED_OK
    if _BUFFERED_OK is None:
        try:
            def _probe(x_ref, o_ref):
                o_ref[...] = x_ref[...] + 1.0

            spec = pl.BlockSpec((8, 128), lambda i: (i, 0),
                                pipeline_mode=pl.Buffered(1))
            out = pl.pallas_call(
                _probe,
                out_shape=jax.ShapeDtypeStruct((16, 128), jnp.float32),
                grid=(2,),
                in_specs=[spec],
                out_specs=pl.BlockSpec((8, 128), lambda i: (i, 0)),
            )(jnp.zeros((16, 128), jnp.float32))
            jax.block_until_ready(out)
            _BUFFERED_OK = True
        except Exception:
            _BUFFERED_OK = False
    return _BUFFERED_OK


def _bspec(shape, index_map, *, buffers=None):
    """BlockSpec; buffers=1 single-buffers grid-invariant operands."""
    if buffers is not None and _buffered_supported():
        try:
            return pl.BlockSpec(shape, index_map,
                                pipeline_mode=pl.Buffered(buffers))
        except (TypeError, AttributeError):
            pass
    return pl.BlockSpec(shape, index_map)


def _pick_row_tile(m):
    """Row tile for (M, C) matmuls: any multiple of 8 dividing M, preferring
    ~512 rows and then >=4 grid steps; falls back to the full M."""
    best_key, best = None, m
    for t in range(8, min(m, 1024) + 1, 8):
        if m % t:
            continue
        key = (min(t, 512), min(m // t, 4), t)
        if best_key is None or key > best_key:
            best_key, best = key, t
    return best


def _pick_fused_tiles(n, ho, wo):
    """(batch-block nb, output-row tile th) for the fused kernel: aim for
    >=256 matmul rows per step, then enough grid steps, then bigger tiles,
    capped at 4096 rows per step."""
    best_key, best = None, (1, 1)
    for th in range(1, ho + 1):
        if ho % th:
            continue
        for nb in range(1, n + 1):
            if n % nb:
                continue
            rows = nb * th * wo
            if rows > 4096 and (th > 1 or nb > 1):
                continue
            steps = (n // nb) * (ho // th)
            key = (min(rows, 256), min(steps, 8), rows)
            if best_key is None or key > best_key:
                best_key, best = key, (nb, th)
    return best


# ---------------------------------------------------------------------------
# Pallas kernels
# ---------------------------------------------------------------------------
def _matmul_bn_act_kernel(x_ref, w_ref, s_ref, b_ref, o_ref, *, relu):
    """o = act((x @ w) * scale + bias); bf16 inputs, f32 MXU accumulation."""
    y = jnp.dot(x_ref[...], w_ref[...], preferred_element_type=jnp.float32)
    y = y * s_ref[...] + b_ref[...]
    if relu:
        y = jnp.maximum(y, 0.0)
    o_ref[...] = y.astype(o_ref.dtype)


def _fused_stage23_kernel(*refs, nb, th, wo, dil, ih, iw, conv_shortcut):
    """Fused 3x3 conv (taps grouped along K, padded copy built in VMEM) +
    BN2 + ReLU + 1x1 conv3 + BN3 + shortcut + residual add + final ReLU.

    refs: y1 (nb,ih,iw,Cm) unpadded stage-1 output, w2g (3,3*Cm,Cmid),
          s2,b2 (1,Cmid), w3 (Cmid,Cout), s3,b3 (1,Cout),
          sc (nb,th,wo,Csc) [, ws (Csc,Cout)], out (nb,th,wo,Cout),
          pad scratch (nb,ih+2d,iw+2d,Cm).
    """
    if conv_shortcut:
        (y1_ref, w2_ref, s2_ref, b2_ref, w3_ref, s3_ref, b3_ref,
         sc_ref, ws_ref, o_ref, pad_ref) = refs
    else:
        (y1_ref, w2_ref, s2_ref, b2_ref, w3_ref, s3_ref, b3_ref,
         sc_ref, o_ref, pad_ref) = refs
        ws_ref = None

    d = dil
    cm = y1_ref.shape[-1]
    cmid = w3_ref.shape[0]
    cout = o_ref.shape[-1]
    m = nb * th * wo

    # Build the zero-padded copy of y1 in VMEM once per batch-block (no HBM
    # jnp.pad round trip).  The h grid axis is "arbitrary" so this carry is
    # valid across the row tiles of one batch-block.
    @pl.when(pl.program_id(1) == 0)
    def _():
        pad_ref[...] = jnp.zeros_like(pad_ref)
        pad_ref[:, d:d + ih, d:d + iw, :] = y1_ref[...]

    row0 = pl.program_id(1) * th

    # 3x3 conv: taps grouped along K per kernel-row -> 3 matmuls of K=3*Cm.
    acc = jnp.zeros((m, cmid), jnp.float32)
    for ky in range(3):
        rows = pad_ref[:, pl.ds(row0 + ky * d, th), :, :]        # (nb,th,Wp,Cm)
        patch = jnp.concatenate(
            [rows[:, :, kx * d: kx * d + wo, :] for kx in range(3)],
            axis=-1).reshape(m, 3 * cm)
        acc += jnp.dot(patch, w2_ref[ky], preferred_element_type=jnp.float32)

    y2 = jnp.maximum(acc * s2_ref[...] + b2_ref[...], 0.0)        # BN2 + ReLU

    r = jnp.dot(y2.astype(w3_ref.dtype), w3_ref[...],             # 1x1 conv3
                preferred_element_type=jnp.float32)
    r = r * s3_ref[...] + b3_ref[...]                             # BN3

    sc = sc_ref[...].reshape(m, sc_ref.shape[-1])
    if conv_shortcut:
        sc = jnp.dot(sc, ws_ref[...], preferred_element_type=jnp.float32)
    else:
        sc = sc.astype(jnp.float32)

    out = jnp.maximum(r + sc, 0.0)                                # residual + ReLU
    o_ref[...] = out.reshape(nb, th, wo, cout).astype(o_ref.dtype)


def _stage3_kernel(*refs, conv_shortcut):
    """Fallback third stage (strided blocks): o = relu(bn3(y2@w3) + shortcut)."""
    if conv_shortcut:
        y2_ref, w3_ref, s3_ref, b3_ref, sc_ref, ws_ref, o_ref = refs
    else:
        y2_ref, w3_ref, s3_ref, b3_ref, sc_ref, o_ref = refs
        ws_ref = None
    r = jnp.dot(y2_ref[...], w3_ref[...], preferred_element_type=jnp.float32)
    r = r * s3_ref[...] + b3_ref[...]
    if conv_shortcut:
        sc = jnp.dot(sc_ref[...], ws_ref[...], preferred_element_type=jnp.float32)
    else:
        sc = sc_ref[...].astype(jnp.float32)
    o_ref[...] = jnp.maximum(r + sc, 0.0).astype(o_ref.dtype)


# ---------------------------------------------------------------------------
# pallas_call wrappers
# ---------------------------------------------------------------------------
def _pallas_matmul_bn_act(x, w, scale, bias, *, relu, out_dtype):
    M, K = x.shape
    N = w.shape[1]
    tm = _pick_row_tile(M)
    kernel = functools.partial(_matmul_bn_act_kernel, relu=relu)
    est = (2 * tm * K * x.dtype.itemsize            # x block (double-buffered)
           + K * N * w.dtype.itemsize               # weights (single-buffered)
           + 4 * N * 4                              # scale + bias
           + 2 * tm * N * np.dtype(out_dtype).itemsize   # out block
           + tm * N * 4)                            # f32 accumulator temp
    return pl.pallas_call(
        kernel,
        out_shape=jax.ShapeDtypeStruct((M, N), out_dtype),
        grid=(M // tm,),
        in_specs=[
            pl.BlockSpec((tm, K), lambda i: (i, 0)),
            _bspec((K, N), lambda i: (0, 0), buffers=1),
            _bspec((1, N), lambda i: (0, 0), buffers=1),
            _bspec((1, N), lambda i: (0, 0), buffers=1),
        ],
        out_specs=pl.BlockSpec((tm, N), lambda i: (i, 0)),
        compiler_params=_compiler_params(("parallel",), est),
    )(x, w, scale, bias)


def _pallas_fused_stage23(y1, w2g, s2, b2, w3, s3, b3, xsc, ws, *, dil):
    """stride-1 fused stage 2+3; y1 NHWC bf16, returns (N,H,W,Cout) bf16."""
    N, H, W, Cm = y1.shape
    Cmid = w2g.shape[2]
    Cout = w3.shape[1]
    Csc = xsc.shape[-1]
    Ho, Wo = H, W
    Hp, Wp = H + 2 * dil, W + 2 * dil
    conv_sc = ws is not None
    nb, th = _pick_fused_tiles(N, Ho, Wo)
    m = nb * th * Wo

    kernel = functools.partial(_fused_stage23_kernel, nb=nb, th=th, wo=Wo,
                               dil=dil, ih=H, iw=W, conv_shortcut=conv_sc)

    in_specs = [
        _bspec((nb, H, W, Cm), lambda n, h: (n, 0, 0, 0), buffers=1),
        _bspec((3, 3 * Cm, Cmid), lambda n, h: (0, 0, 0), buffers=1),
        _bspec((1, Cmid), lambda n, h: (0, 0), buffers=1),
        _bspec((1, Cmid), lambda n, h: (0, 0), buffers=1),
        _bspec((Cmid, Cout), lambda n, h: (0, 0), buffers=1),
        _bspec((1, Cout), lambda n, h: (0, 0), buffers=1),
        _bspec((1, Cout), lambda n, h: (0, 0), buffers=1),
        pl.BlockSpec((nb, th, Wo, Csc), lambda n, h: (n, h, 0, 0)),
    ]
    args = [y1, w2g, s2, b2, w3, s3, b3, xsc]
    if conv_sc:
        in_specs.append(_bspec((Csc, Cout), lambda n, h: (0, 0), buffers=1))
        args.append(ws)

    est = (nb * H * W * Cm * 2                      # y1 block
           + nb * Hp * Wp * Cm * 2                  # padded VMEM scratch
           + 9 * Cm * Cmid * 2 + Cmid * Cout * 2    # weights
           + (Csc * Cout * 2 if conv_sc else 0)
           + 2 * nb * th * Wo * Csc * 2             # shortcut block
           + 2 * nb * th * Wo * Cout * 2            # output block
           + m * 3 * Cm * 2                         # patch temp (bf16)
           + 2 * m * Cmid * 4                       # acc + y2 temps (f32)
           + 2 * m * Cout * 4)                      # r + shortcut temps (f32)

    return pl.pallas_call(
        kernel,
        out_shape=jax.ShapeDtypeStruct((N, Ho, Wo, Cout), jnp.bfloat16),
        grid=(N // nb, Ho // th),
        in_specs=in_specs,
        out_specs=pl.BlockSpec((nb, th, Wo, Cout), lambda n, h: (n, h, 0, 0)),
        scratch_shapes=[pltpu.VMEM((nb, Hp, Wp, Cm), jnp.bfloat16)],
        compiler_params=_compiler_params(("parallel", "arbitrary"), est),
    )(*args)


def _pallas_stage3(y2, w3, s3, b3, sc, ws):
    M, K = y2.shape
    Nc = w3.shape[1]
    Ks = sc.shape[1]
    conv_sc = ws is not None
    tm = _pick_row_tile(M)
    kernel = functools.partial(_stage3_kernel, conv_shortcut=conv_sc)
    in_specs = [
        pl.BlockSpec((tm, K), lambda i: (i, 0)),
        _bspec((K, Nc), lambda i: (0, 0), buffers=1),
        _bspec((1, Nc), lambda i: (0, 0), buffers=1),
        _bspec((1, Nc), lambda i: (0, 0), buffers=1),
        pl.BlockSpec((tm, Ks), lambda i: (i, 0)),
    ]
    args = [y2, w3, s3, b3, sc]
    if conv_sc:
        in_specs.append(_bspec((Ks, Nc), lambda i: (0, 0), buffers=1))
        args.append(ws)
    est = (2 * tm * K * 2 + K * Nc * 2 + 2 * tm * Ks * 2
           + (Ks * Nc * 2 if conv_sc else 0)
           + 2 * tm * Nc * 2 + 2 * tm * Nc * 4)
    return pl.pallas_call(
        kernel,
        out_shape=jax.ShapeDtypeStruct((M, Nc), jnp.bfloat16),
        grid=(M // tm,),
        in_specs=in_specs,
        out_specs=pl.BlockSpec((tm, Nc), lambda i: (i, 0)),
        compiler_params=_compiler_params(("parallel",), est),
    )(*args)


# ---------------------------------------------------------------------------
# Parameter init (PyTorch layouts: conv weights OIHW, BN per-channel vectors)
# ---------------------------------------------------------------------------
def _conv_w(k, o, i, kh, kw):
    fan_in = i * kh * kw
    return jax.random.normal(k, (o, i, kh, kw), jnp.float32) / jnp.sqrt(fan_in)


def _bn_p(k, c):
    k1, k2, k3, k4 = jax.random.split(k, 4)
    return dict(
        gamma=jax.random.uniform(k1, (c,), minval=0.5, maxval=1.5),
        beta=jax.random.normal(k2, (c,)) * 0.1,
        mean=jax.random.normal(k3, (c,)) * 0.1,
        var=jax.random.uniform(k4, (c,), minval=0.5, maxval=1.5),
    )


def init_bottleneck_params(key, in_dims, out_dims, stride):
    cm = out_dims
    cout = out_dims * EXPANSION
    keys = jax.random.split(key, 7)
    params = dict(
        w1=_conv_w(keys[0], cm, in_dims, 1, 1), bn1=_bn_p(keys[1], cm),
        w2=_conv_w(keys[2], cm, cm, 3, 3),      bn2=_bn_p(keys[3], cm),
        w3=_conv_w(keys[4], cout, cm, 1, 1),    bn3=_bn_p(keys[5], cout),
    )
    if stride != 1 or in_dims != cout:
        params["ws"] = _conv_w(keys[6], cout, in_dims, 1, 1)
    return params


def init_resnet_params(key, in_channels, num_blocks, cfgs, output_stride=8):
    if output_stride == 8:
        stride_lists, atrous_rates = [1, 2, 1, 1], [1, 1, 2, 4]
    elif output_stride == 16:
        stride_lists, atrous_rates = [1, 2, 2, 1], [1, 1, 1, 2]
    else:
        raise ValueError(output_stride)
    keys = jax.random.split(key, 2 + len(num_blocks))
    params = dict(stem_w=_conv_w(keys[0], cfgs[0], in_channels, 7, 7),
                  stem_bn=_bn_p(keys[1], cfgs[0]), stages=[])
    in_dims = cfgs[0]
    for si, nblk in enumerate(num_blocks):
        stage = []
        strides = [stride_lists[si]] + [1] * (nblk - 1)
        skeys = jax.random.split(keys[2 + si], nblk)
        for bi, s in enumerate(strides):
            stage.append(dict(
                params=init_bottleneck_params(skeys[bi], in_dims, cfgs[si], s),
                stride=s, dilation=atrous_rates[si]))
            in_dims = cfgs[si] * EXPANSION
        params["stages"].append(stage)
    return params


def _fold_bn(bn):
    scale = bn["gamma"] / jnp.sqrt(bn["var"] + BN_EPS)
    bias = bn["beta"] - bn["mean"] * scale
    return (scale.reshape(1, -1).astype(jnp.float32),
            bias.reshape(1, -1).astype(jnp.float32))


# ---------------------------------------------------------------------------
# Bottleneck forward (NHWC bf16 internally; NCHW f32 wrapper for block tests)
# ---------------------------------------------------------------------------
def bottleneck_forward_nhwc(x, params, *, stride=1, dilation=1):
    """x: (N, H, W, Cin) bf16 NHWC.  Returns (N, Ho, Wo, Cout) bf16 NHWC."""
    N, H, W, Cin = x.shape
    s1, b1 = _fold_bn(params["bn1"])
    s2, b2 = _fold_bn(params["bn2"])
    s3, b3 = _fold_bn(params["bn3"])

    w1 = params["w1"][:, :, 0, 0].T.astype(jnp.bfloat16)            # (Cin, Cm)
    Cm = w1.shape[1]
    w3 = params["w3"][:, :, 0, 0].T.astype(jnp.bfloat16)            # (Cm, Cout)
    Cout = w3.shape[1]

    d = dilation
    Ho = (H - 1) // stride + 1
    Wo = (W - 1) // stride + 1

    # stage 1: 1x1 conv + BN + ReLU (fused Pallas matmul, bf16 output)
    y1 = _pallas_matmul_bn_act(x.reshape(N * H * W, Cin), w1, s1, b1,
                               relu=True, out_dtype=jnp.bfloat16)
    y1 = y1.reshape(N, H, W, Cm)

    conv_sc = "ws" in params
    ws = params["ws"][:, :, 0, 0].T.astype(jnp.bfloat16) if conv_sc else None
    xsc = x if stride == 1 else x[:, ::stride, ::stride, :]         # (N,Ho,Wo,Csc)

    if stride == 1:
        # fused stage 2+3 (padding built in VMEM; taps grouped along K).
        w2g = jnp.transpose(params["w2"], (2, 3, 1, 0)).reshape(3, 3 * Cm, Cm)
        out = _pallas_fused_stage23(y1, w2g.astype(jnp.bfloat16),
                                    s2, b2, w3, s3, b3, xsc, ws, dil=d)
    else:
        # TODO(synk): stride>1 blocks use a wrapper-side im2col + two Pallas
        # matmul kernels; a fused strided variant is future work.
        y1p = jnp.pad(y1, ((0, 0), (d, d), (d, d), (0, 0)))
        cols = []
        for ky in range(3):
            for kx in range(3):
                cols.append(
                    y1p[:,
                        ky * d: ky * d + (Ho - 1) * stride + 1: stride,
                        kx * d: kx * d + (Wo - 1) * stride + 1: stride, :])
        patches = jnp.concatenate(cols, axis=-1).reshape(N * Ho * Wo, 9 * Cm)
        w2f = jnp.transpose(params["w2"], (2, 3, 1, 0)).reshape(9 * Cm, Cm)
        y2 = _pallas_matmul_bn_act(patches, w2f.astype(jnp.bfloat16), s2, b2,
                                   relu=True, out_dtype=jnp.bfloat16)
        sc_flat = xsc.reshape(N * Ho * Wo, xsc.shape[-1])
        out = _pallas_stage3(y2, w3, s3, b3, sc_flat, ws)
        out = out.reshape(N, Ho, Wo, Cout)
    return out


def bottleneck_forward(x_nchw, params, *, stride=1, dilation=1):
    """NCHW f32 boundary wrapper around the NHWC bf16 block (for block tests).
    Note: the identity shortcut adds the bf16-rounded input (documented)."""
    x = jnp.transpose(x_nchw, (0, 2, 3, 1)).astype(jnp.bfloat16)
    out = bottleneck_forward_nhwc(x, params, stride=stride, dilation=dilation)
    return jnp.transpose(out.astype(jnp.float32), (0, 3, 1, 2))


# ---------------------------------------------------------------------------
# ResNet forward (stem + maxpool + 4 Bottleneck stages); NHWC bf16 internally,
# NCHW f32 only at the network boundary.
# ---------------------------------------------------------------------------
def resnet_forward(x_nchw, params):
    x = jnp.transpose(x_nchw, (0, 2, 3, 1)).astype(jnp.bfloat16)     # NHWC once
    N, H, W, Cin = x.shape

    # Stem: 7x7/2 conv + BN + ReLU via im2col + the fused matmul kernel.
    C0 = params["stem_w"].shape[0]
    Ho, Wo = (H - 1) // 2 + 1, (W - 1) // 2 + 1
    xp = jnp.pad(x, ((0, 0), (3, 3), (3, 3), (0, 0)))
    cols = []
    for ky in range(7):
        for kx in range(7):
            cols.append(xp[:, ky: ky + (Ho - 1) * 2 + 1: 2,
                           kx: kx + (Wo - 1) * 2 + 1: 2, :])
    patches = jnp.concatenate(cols, axis=-1).reshape(N * Ho * Wo, 49 * Cin)
    w_stem = jnp.transpose(params["stem_w"], (2, 3, 1, 0)).reshape(49 * Cin, C0)
    s0, b0 = _fold_bn(params["stem_bn"])
    y = _pallas_matmul_bn_act(patches, w_stem.astype(jnp.bfloat16), s0, b0,
                              relu=True, out_dtype=jnp.bfloat16)
    y = y.reshape(N, Ho, Wo, C0)

    # MaxPool 3x3 / stride 2 / pad 1 (XLA reduce_window; see TODO in header).
    y = jax.lax.reduce_window(y.astype(jnp.float32), jnp.float32(-jnp.inf),
                              jax.lax.max, (1, 3, 3, 1), (1, 2, 2, 1),
                              [(0, 0), (1, 1), (1, 1), (0, 0)])
    y = y.astype(jnp.bfloat16)

    low_level = None
    for si, stage in enumerate(params["stages"]):
        for blk in stage:
            y = bottleneck_forward_nhwc(y, blk["params"],
                                        stride=blk["stride"],
                                        dilation=blk["dilation"])
        if si == 0:
            low_level = y

    out = jnp.transpose(y.astype(jnp.float32), (0, 3, 1, 2))
    low = jnp.transpose(low_level.astype(jnp.float32), (0, 3, 1, 2))
    return out, low


# ---------------------------------------------------------------------------
# Pure-JAX references (f32) for correctness checking
# ---------------------------------------------------------------------------
def _bn_ref(y, b):
    scale = b["gamma"] / jnp.sqrt(b["var"] + BN_EPS)
    bias = b["beta"] - b["mean"] * scale
    return y * scale[None, :, None, None] + bias[None, :, None, None]


def bottleneck_reference(x_nchw, params, *, stride=1, dilation=1):
    dn = ("NCHW", "OIHW", "NCHW")
    y = jax.lax.conv_general_dilated(x_nchw, params["w1"], (1, 1), "VALID",
                                     dimension_numbers=dn)
    y = jax.nn.relu(_bn_ref(y, params["bn1"]))
    y = jax.lax.conv_general_dilated(y, params["w2"], (stride, stride),
                                     [(dilation, dilation), (dilation, dilation)],
                                     rhs_dilation=(dilation, dilation),
                                     dimension_numbers=dn)
    y = jax.nn.relu(_bn_ref(y, params["bn2"]))
    y = jax.lax.conv_general_dilated(y, params["w3"], (1, 1), "VALID",
                                     dimension_numbers=dn)
    y = _bn_ref(y, params["bn3"])
    if "ws" in params:
        sc = jax.lax.conv_general_dilated(x_nchw, params["ws"], (stride, stride),
                                          "VALID", dimension_numbers=dn)
    else:
        sc = x_nchw
    return jax.nn.relu(y + sc)


def resnet_reference(x_nchw, params):
    dn = ("NCHW", "OIHW", "NCHW")
    y = jax.lax.conv_general_dilated(x_nchw, params["stem_w"], (2, 2),
                                     [(3, 3), (3, 3)], dimension_numbers=dn)
    y = jax.nn.relu(_bn_ref(y, params["stem_bn"]))
    y = jax.lax.reduce_window(y, jnp.float32(-jnp.inf), jax.lax.max,
                              (1, 1, 3, 3), (1, 1, 2, 2),
                              [(0, 0), (0, 0), (1, 1), (1, 1)])
    low = None
    for si, stage in enumerate(params["stages"]):
        for blk in stage:
            y = bottleneck_reference(y, blk["params"],
                                     stride=blk["stride"],
                                     dilation=blk["dilation"])
        if si == 0:
            low = y
    return y, low


# ---------------------------------------------------------------------------
if __name__ == "__main__":
    key = jax.random.PRNGKey(0)

    # --- standalone Bottleneck block checks (NCHW f32 boundary) -------------
    N, H, W = 2, 16, 16
    configs = [
        dict(in_dims=4,  out_dims=4, stride=1, dilation=1),  # conv shortcut, fused
        dict(in_dims=16, out_dims=4, stride=1, dilation=2),  # identity, dilated, fused
        dict(in_dims=8,  out_dims=4, stride=2, dilation=1),  # strided (fallback)
    ]
    for cfg in configs:
        kx, kp, key = jax.random.split(key, 3)
        x = jax.random.normal(kx, (N, cfg["in_dims"], H, W), dtype=jnp.float32)
        params = init_bottleneck_params(kp, cfg["in_dims"], cfg["out_dims"],
                                        cfg["stride"])
        out = jax.block_until_ready(
            bottleneck_forward(x, params, stride=cfg["stride"],
                               dilation=cfg["dilation"]))
        ref = bottleneck_reference(x, params, stride=cfg["stride"],
                                   dilation=cfg["dilation"])
        Ho = (H - 1) // cfg["stride"] + 1
        Wo = (W - 1) // cfg["stride"] + 1
        expected = (N, cfg["out_dims"] * EXPANSION, Ho, Wo)
        assert out.shape == ref.shape == expected, (out.shape, ref.shape, expected)
        max_err = float(jnp.max(jnp.abs(out - ref)))
        scale = float(jnp.max(jnp.abs(ref)))
        # bf16 activations with f32 accumulation: 5% of output range.
        assert max_err <= 5e-2 * max(1.0, scale), (cfg, max_err, scale)

    # --- small end-to-end ResNet (stem + maxpool + 4 bottleneck stages) -----
    kx, kp, key = jax.random.split(key, 3)
    x = jax.random.normal(kx, (2, 3, 64, 64), dtype=jnp.float32)
    rparams = init_resnet_params(kp, in_channels=3, num_blocks=[2, 1, 1, 1],
                                 cfgs=[8, 16, 32, 64], output_stride=8)
    out, low = jax.block_until_ready(resnet_forward(x, rparams))
    ref_out, ref_low = resnet_reference(x, rparams)

    assert out.shape == ref_out.shape == (2, 64 * EXPANSION, 8, 8), out.shape
    assert low.shape == ref_low.shape == (2, 8 * EXPANSION, 16, 16), low.shape

    def rel_l2(a, b):
        return float(jnp.linalg.norm(a - b) / (jnp.linalg.norm(b) + 1e-6))

    assert rel_l2(out, ref_out) < 8e-2, rel_l2(out, ref_out)
    assert rel_l2(low, ref_low) < 8e-2, rel_l2(low, ref_low)

    print("KERNEL_OK")
</pallas_src>

<mosaic_0001>
module attributes {stable_mosaic.version = 11 : i64} {
  func.func @_probe(%arg0: i32, %arg1: memref<8x128xf32, #tpu.memory_space<vmem>>, %arg2: memref<8x128xf32, #tpu.memory_space<vmem>>) attributes {dimension_semantics = [#tpu.dimension_semantics<arbitrary>], iteration_bounds = array<i64: 2>, scalar_prefetch = 0 : i64, scratch_operands = 0 : i64, tpu.core_type = #tpu.core_type<tc>, window_params = [{pipeline_mode = #tpu.pipeline_mode<synchronous>, transform_indices = @transform_0, window_bounds = array<i64: 8, 128>}, {transform_indices = @transform_1, window_bounds = array<i64: 8, 128>}]} {
    %c0 = arith.constant 0 : index
    %c0_0 = arith.constant 0 : index
    %0 = vector.load %arg1[%c0, %c0_0] : memref<8x128xf32, #tpu.memory_space<vmem>>, vector<8x128xf32>
    %cst = arith.constant 1.000000e+00 : f32
    %1 = vector.broadcast %cst : f32 to vector<8x128xf32>
    %2 = arith.addf %0, %1 : vector<8x128xf32>
    %c0_1 = arith.constant 0 : index
    %c0_2 = arith.constant 0 : index
    %3 = vector.load %arg2[%c0_1, %c0_2] : memref<8x128xf32, #tpu.memory_space<vmem>>, vector<8x128xf32>
    tpu.vector_store %arg2[%c0_1, %c0_2], %2 {strides = array<i32>} : memref<8x128xf32, #tpu.memory_space<vmem>>, vector<8x128xf32>,
    return
  }
  func.func @transform_0(%arg0: i32) -> (i32, i32) {
    %c0_i32 = arith.constant 0 : i32
    %c0_i32_0 = arith.constant 0 : i32
    return %arg0, %c0_i32 : i32, i32
  }
  func.func @transform_1(%arg0: i32) -> (i32, i32) {
    %c0_i32 = arith.constant 0 : i32
    %c0_i32_0 = arith.constant 0 : i32
    return %arg0, %c0_i32 : i32, i32
  }
}

module attributes {stable_mosaic.version = 11 : i64} {
  func.func @_matmul_bn_act_kernel(%arg0: i32, %arg1: memref<512x4xbf16, #tpu.memory_space<vmem>>, %arg2: memref<4x4xbf16, #tpu.memory_space<vmem>>, %arg3: memref<1x4xf32, #tpu.memory_space<vmem>>, %arg4: memref<1x4xf32, #tpu.memory_space<vmem>>, %arg5: memref<512x4xbf16, #tpu.memory_space<vmem>>) attributes {dimension_semantics = [#tpu.dimension_semantics<parallel>], iteration_bounds = array<i64: 1>, scalar_prefetch = 0 : i64, scratch_operands = 0 : i64, tpu.core_type = #tpu.core_type<tc>, window_params = [{transform_indices = @transform_0, window_bounds = array<i64: 512, 4>}, {pipeline_mode = #tpu.pipeline_mode<synchronous>, transform_indices = @transform_1, window_bounds = array<i64: 4, 4>}, {pipeline_mode = #tpu.pipeline_mode<synchronous>, transform_indices = @transform_2, window_bounds = array<i64: 1, 4>}, {pipeline_mode = #tpu.pipeline_mode<synchronous>, transform_indices = @transform_3, window_bounds = array<i64: 1, 4>}, {transform_indices = @transform_4, window_bounds = array<i64: 512, 4>}]} {
    %c0 = arith.constant 0 : index
    %c0_0 = arith.constant 0 : index
    %0 = vector.load %arg1[%c0, %c0_0] : memref<512x4xbf16, #tpu.memory_space<vmem>>, vector<512x4xbf16>
    %c0_1 = arith.constant 0 : index
    %c0_2 = arith.constant 0 : index
    %1 = vector.load %arg2[%c0_1, %c0_2] : memref<4x4xbf16, #tpu.memory_space<vmem>>, vector<4x4xbf16>
    %cst = arith.constant dense<0.000000e+00> : vector<512x4xf32>
    %2 = tpu.matmul %0, %1, %cst {dimension_numbers = #tpu.dot_dimension_numbers<[1], [0], [0], [1], [0, 0, 1, 1], [], []>} : vector<512x4xbf16>, vector<4x4xbf16>, vector<512x4xf32> -> vector<512x4xf32>
    %c0_3 = arith.constant 0 : index
    %c0_4 = arith.constant 0 : index
    %3 = vector.load %arg3[%c0_3, %c0_4] : memref<1x4xf32, #tpu.memory_space<vmem>>, vector<1x4xf32>
    %4 = vector.broadcast %3 : vector<1x4xf32> to vector<512x4xf32>
    %5 = arith.mulf %2, %4 : vector<512x4xf32>
    %c0_5 = arith.constant 0 : index
    %c0_6 = arith.constant 0 : index
    %6 = vector.load %arg4[%c0_5, %c0_6] : memref<1x4xf32, #tpu.memory_space<vmem>>, vector<1x4xf32>
    %7 = vector.broadcast %6 : vector<1x4xf32> to vector<512x4xf32>
    %8 = arith.addf %5, %7 : vector<512x4xf32>
    %cst_7 = arith.constant 0.000000e+00 : f32
    %9 = vector.broadcast %cst_7 : f32 to vector<512x4xf32>
    %10 = arith.maximumf %8, %9 : vector<512x4xf32>
    %11 = arith.truncf %10 : vector<512x4xf32> to vector<512x4xbf16>
    %c0_8 = arith.constant 0 : index
    %c0_9 = arith.constant 0 : index
    %12 = vector.load %arg5[%c0_8, %c0_9] : memref<512x4xbf16, #tpu.memory_space<vmem>>, vector<512x4xbf16>
    tpu.vector_store %arg5[%c0_8, %c0_9], %11 {strides = array<i32>} : memref<512x4xbf16, #tpu.memory_space<vmem>>, vector<512x4xbf16>,
    return
  }
  func.func @transform_0(%arg0: i32) -> (i32, i32) {
    %c0_i32 = arith.constant 0 : i32
    %c0_i32_0 = arith.constant 0 : i32
    return %arg0, %c0_i32 : i32, i32
  }
  func.func @transform_1(%arg0: i32) -> (i32, i32) {
    %c0_i32 = arith.constant 0 : i32
    %c0_i32_0 = arith.constant 0 : i32
    %c0_i32_1 = arith.constant 0 : i32
    return %c0_i32, %c0_i32_0 : i32, i32
  }
  func.func @transform_2(%arg0: i32) -> (i32, i32) {
    %c0_i32 = arith.constant 0 : i32
    %c0_i32_0 = arith.constant 0 : i32
    %c0_i32_1 = arith.constant 0 : i32
    return %c0_i32, %c0_i32_0 : i32, i32
  }
  func.func @transform_3(%arg0: i32) -> (i32, i32) {
    %c0_i32 = arith.constant 0 : i32
    %c0_i32_0 = arith.constant 0 : i32
    %c0_i32_1 = arith.constant 0 : i32
    return %c0_i32, %c0_i32_0 : i32, i32
  }
  func.func @transform_4(%arg0: i32) -> (i32, i32) {
    %c0_i32 = arith.constant 0 : i32
    %c0_i32_0 = arith.constant 0 : i32
    return %arg0, %c0_i32 : i32, i32
  }
}

</mosaic_0001>

<llo_original>
// kernel: tpu_custom_call.1
$region0: #{tpu_custom_call.1}
  #allocation0 [shape = 'u32[]', space=smem, size = 0x4, offset = 0x4, fixed_abs, tag = 'smem constant byte address 0x4 - core index']
  #allocation1 [shape = 'u32[144,128]{1,0:T(1,128)}', space=vmem, size = 0x12000, scoped, tag = 'internal scratch']
  %s0 = inlined_call_operand.hbm [shape: f32[16,128], index: 0, kind: input, shape index: {}]
  %s1 = inlined_call_operand.hbm [shape: f32[16,128], index: 1, kind: output, shape index: {}]
  %s2 = sld [smem:[#allocation0]]
  $region41: #{tpu_custom_call.1} parent=0
    _
  %s4 = ssub.s32 1, %s2
  %s5 = scalar_select 0, %s4, %s2
  $region1: #{tpu_custom_call.1} parent=0
    #allocation2 [shape = 'u8[4096]{0}', space=vmem, size = 0x1000, scoped, tag = 'input window, operand 0, single buffered']
    #allocation3 [shape = 's32[2]{0}', space=sflag, size = 0x8, scoped, tag = 'scoped memory for tpu_custom_call.1']
    #allocation4 [shape = 's32[2]{0}', space=sflag, size = 0x8, scoped, tag = 'scoped memory for tpu_custom_call.1']
    #allocation5 [shape = 'u8[8192]{0}', space=vmem, size = 0x2000, scoped, tag = 'output window, operand 0']
    %6 = vsyncpa [#allocation3], 0
    %7 = vsyncpa [#allocation4], 0
    %s8 = scalar_lea.sflag [#allocation4], 1
    %9 = vsyncpa %s8, 0
    loop: start=0, step=1, limit=4
    $region2: #{tpu_custom_call.1} parent=1 // loop_pre_header
      _
    $region3: #{tpu_custom_call.1} parent=1 // loop_header
      %s11 = sphi 0, %s15
      %p12 = scmp.ge.s32.totalorder %s11, 4
      %s21 = sphi 0, %s23
      %s24 = sphi 0, %s21
      %s25 = sphi 0, %s24
      %s41 = sphi 0, %s25
      %s47 = sphi 0, %s49
      %s50 = sphi 0, %s47
      %s51 = sphi 0, %s50
      %s67 = sphi 0, %s51
    $region4: #{tpu_custom_call.1} parent=1 // loop_header_branch
      %14 = sbr.rel (%p12) target = $region8
    $region5: #{tpu_custom_call.1} parent=1 // loop_body
      %s16 = ssub.s32 %s11, 1
      %s17 = ssub.s32 %s11, 2
      %s18 = sadd.s32 %s11, 1
      %s19 = ssub.s32 %s11, %s18
      %p20 = scmp.eq.s32.totalorder %s19, 0
      %s22 = sadd.s32 %s21, 1
      %s23 = scalar_select %p20, %s21, %s22
      %p26 = pneg %p20
      %p27 = scmp.eq.s32.totalorder %s11, 1
      %p28 = por %p26, %p27
      %p29 = scmp.ne.s32.totalorder %s21, %s24
      %p30 = scmp.eq.s32.totalorder %s11, 0
      %p31 = por %p29, %p30
      %p32 = scmp.ne.s32.totalorder %s21, %s24
      %p33 = scmp.eq.s32.totalorder %s16, 1
      %p34 = por %p32, %p33
      %p35 = scmp.ne.s32.totalorder %s24, %s25
      %p36 = scmp.eq.s32.totalorder %s16, 0
      %p37 = por %p35, %p36
      %p38 = scmp.ne.s32.totalorder %s24, %s25
      %p39 = scmp.eq.s32.totalorder %s17, 1
      %p40 = por %p38, %p39
      %p42 = scmp.ne.s32.totalorder %s25, %s41
      %p43 = scmp.eq.s32.totalorder %s17, 0
      %p44 = por %p42, %p43
      %s45 = ssub.s32 %s11, %s18
      %p46 = scmp.eq.s32.totalorder %s45, 0
      %s48 = sadd.s32 %s47, 1
      %s49 = scalar_select %p46, %s47, %s48
      %p52 = pneg %p46
      %p53 = scmp.eq.s32.totalorder %s11, 1
      %p54 = por %p52, %p53
      %p55 = scmp.ne.s32.totalorder %s47, %s50
      %p56 = scmp.eq.s32.totalorder %s11, 0
      %p57 = por %p55, %p56
      %p58 = scmp.ne.s32.totalorder %s47, %s50
      %p59 = scmp.eq.s32.totalorder %s16, 1
      %p60 = por %p58, %p59
      %p61 = scmp.ne.s32.totalorder %s50, %s51
      %p62 = scmp.eq.s32.totalorder %s16, 0
      %p63 = por %p61, %p62
      %p64 = scmp.ne.s32.totalorder %s50, %s51
      %p65 = scmp.eq.s32.totalorder %s17, 1
      %p66 = por %p64, %p65
      %p68 = scmp.ne.s32.totalorder %s51, %s67
      %p69 = scmp.eq.s32.totalorder %s17, 0
      %p70 = por %p68, %p69
      %p71 = scmp.le.s32.totalorder 1, %s11
      %p72 = scmp.lt.s32.totalorder %s11, 3
      %p73 = pnand %p71, %p72
      %p74 = pneg %p73
      // Predicated region
      $region9: #{tpu_custom_call.1} parent=5 // pred_check
        _
      $region10: #{tpu_custom_call.1} parent=5 // pred_check_branch
        %76 = sbr.rel (%p73) target = $region12
      $region11: #{tpu_custom_call.1} parent=5 // pred_region
        %s77 = ssub.s32 %s11, 1
        // Predicated region
        $region13: #{tpu_custom_call.1} parent=11 // pred_check
          %p78 = pneg %p37
        $region14: #{tpu_custom_call.1} parent=11 // pred_check_branch
          %80 = sbr.rel (%p78) target = $region16
        $region15: #{tpu_custom_call.1} parent=11 // pred_region
          %s82 = ssub.s32 128, 128
          %83 = vsyncadd [#allocation3], %s82
          %s84 = smul.addr %s16, 128
          %s85 = scalar_lea.hbm %s0, %s84
          %s87 = sshll.u32 [#allocation2], 4
          %s88 = int_to_ptr.vmem [resolvable:$true] %s87
          %90 = dma.hbm_to_vmem [thread:$0]  %s85, 128, %s88, [#allocation3]
        $region16: #{tpu_custom_call.1} parent=11 // pred_fallthru
          _
      $region12: #{tpu_custom_call.1} parent=5 // pred_fallthru
        _
      %p91 = scmp.lt.s32.totalorder %s11, 2
      // Predicated region
      $region17: #{tpu_custom_call.1} parent=5 // pred_check
        %p92 = pneg %p91
      $region18: #{tpu_custom_call.1} parent=5 // pred_check_branch
        %94 = sbr.rel (%p92) target = $region20
      $region19: #{tpu_custom_call.1} parent=5 // pred_region
        _
      $region20: #{tpu_custom_call.1} parent=5 // pred_fallthru
        _
      %p95 = scmp.le.s32.totalorder 1, %s11
      %p96 = scmp.lt.s32.totalorder %s11, 3
      %p97 = pnand %p95, %p96
      %p98 = pneg %p97
      // Predicated region
      $region21: #{tpu_custom_call.1} parent=5 // pred_check
        _
      $region22: #{tpu_custom_call.1} parent=5 // pred_check_branch
        %100 = sbr.rel (%p97) target = $region24
      $region23: #{tpu_custom_call.1} parent=5 // pred_region
        %s101 = ssub.s32 %s11, 1
        // Predicated region
        $region25: #{tpu_custom_call.1} parent=23 // pred_check
          %p102 = pneg %p37
        $region26: #{tpu_custom_call.1} parent=23 // pred_check_branch
          %104 = sbr.rel (%p102) target = $region28
        $region27: #{tpu_custom_call.1} parent=23 // pred_region
          %105 = dma.done [#allocation3], 128
        $region28: #{tpu_custom_call.1} parent=23 // pred_fallthru
          _
        %p106 = pneg %p37
        %p107 = pneg %p34
        %p108 = pneg %p63
        %p109 = pneg %p60
        %s110 = sand.u32 %s50, 1
        %s111 = scalar_lea.sflag [#allocation4], %s110
        %s112 = sand.u32 %s50, 1
        %s113 = smul.addr %s112, 8
        %s114 = scalar_lea.vmem [#allocation5], %s113
        %v115 = vld [vmem:[#allocation2] sm:$0xff]
        %v116 = vadd.f32 %v115, 1.0
        %117 = vst [vmem:[%s114] sm:$0xff] %v116
        %s118 = sand.u32 %s50, 1
        %s119 = scalar_lea.sflag [#allocation4], %s118
        %s120 = sand.u32 %s50, 1
        %s121 = smul.addr %s120, 8
        %s122 = scalar_lea.vmem [#allocation5], %s121
        // Predicated region
        $region29: #{tpu_custom_call.1} parent=23 // pred_check
          %p123 = pneg %p60
        $region30: #{tpu_custom_call.1} parent=23 // pred_check_branch
          %125 = sbr.rel (%p123) target = $region32
        $region31: #{tpu_custom_call.1} parent=23 // pred_region
          %s127 = ssub.s32 128, 128
          %128 = vsyncadd %s119, %s127
          %s129 = smul.addr %s16, 128
          %s130 = scalar_lea.hbm %s1, %s129
          %s132 = sshll.u32 %s122, 4
          %s133 = int_to_ptr.vmem [resolvable:$true] %s132
          %135 = dma.vmem_to_hbm [thread:$0]  %s133, 128, %s130, %s119
        $region32: #{tpu_custom_call.1} parent=23 // pred_fallthru
          _
      $region24: #{tpu_custom_call.1} parent=5 // pred_fallthru
        _
      %p136 = scmp.le.s32.totalorder 2, %s11
      // Predicated region
      $region33: #{tpu_custom_call.1} parent=5 // pred_check
        %p137 = pneg %p136
      $region34: #{tpu_custom_call.1} parent=5 // pred_check_branch
        %139 = sbr.rel (%p137) target = $region36
      $region35: #{tpu_custom_call.1} parent=5 // pred_region
        %s140 = ssub.s32 %s11, 2
        // Predicated region
        $region37: #{tpu_custom_call.1} parent=35 // pred_check
          %p141 = pneg %p66
        $region38: #{tpu_custom_call.1} parent=35 // pred_check_branch
          %143 = sbr.rel (%p141) target = $region40
        $region39: #{tpu_custom_call.1} parent=35 // pred_region
          %s144 = sand.u32 %s51, 1
          %s145 = scalar_lea.sflag [#allocation4], %s144
          %s146 = sand.u32 %s51, 1
          %s147 = smul.addr %s146, 8
          %s148 = scalar_lea.vmem [#allocation5], %s147
          %149 = dma.done %s145, 128
        $region40: #{tpu_custom_call.1} parent=35 // pred_fallthru
          _
      $region36: #{tpu_custom_call.1} parent=5 // pred_fallthru
        _
    $region6: #{tpu_custom_call.1} parent=1 // loop_footer
      %s15 = sadd.s32 1, %s11
    $region7: #{tpu_custom_call.1} parent=1 // loop_footer_branch
      %10 = sbr.rel target = $region3
    $region8: #{tpu_custom_call.1} parent=1 // loop_exit
      _
    %150 = vsyncpa [#allocation3], 1
    %s151 = scalar_lea.sflag [#allocation3], 1
    %152 = vsyncpa %s151, 1
    %153 = vsyncpa [#allocation4], 1
    %s154 = scalar_lea.sflag [#allocation4], 1
    %155 = vsyncpa %s154, 1

// kernel: tpu_custom_call.1
$region0: #{tpu_custom_call.1}
  #allocation0 [shape = 'u32[]', space=smem, size = 0x4, offset = 0x4, fixed_abs, tag = 'smem constant byte address 0x4 - core index']
  #allocation1 [shape = 'u32[144,128]{1,0:T(1,128)}', space=vmem, size = 0x12000, scoped, tag = 'internal scratch']
  %s0 = inlined_call_operand.vmem [shape: bf16[512,4], index: 0, kind: input, shape index: {}]
  %s1 = inlined_call_operand.vmem [shape: bf16[4,4], index: 1, kind: input, shape index: {}]
  %s2 = inlined_call_operand.vmem [shape: f32[1,4], index: 2, kind: input, shape index: {}]
  %s3 = inlined_call_operand.vmem [shape: f32[1,4], index: 3, kind: input, shape index: {}]
  %s4 = inlined_call_operand.vmem [shape: bf16[512,4], index: 4, kind: output, shape index: {}]
  %s5 = sld [smem:[#allocation0]]
  $region26: #{tpu_custom_call.1} parent=0
    _
  %s7 = ssub.s32 1, %s5
  %s8 = scalar_select 0, %s7, %s5
  // Predicated region
  $region2: #{tpu_custom_call.1} parent=0 // pred_check
    _
  $region3: #{tpu_custom_call.1} parent=0 // pred_check_branch
    %10 = sbr.rel (0) target = $region5
  $region4: #{tpu_custom_call.1} parent=0 // pred_region
    _
  $region5: #{tpu_custom_call.1} parent=0 // pred_fallthru
    _
  // Predicated region
  $region6: #{tpu_custom_call.1} parent=0 // pred_check
    _
  $region7: #{tpu_custom_call.1} parent=0 // pred_check_branch
    %12 = sbr.rel (0) target = $region9
  $region8: #{tpu_custom_call.1} parent=0 // pred_region
    _
  $region9: #{tpu_custom_call.1} parent=0 // pred_fallthru
    _
  // Predicated region
  $region10: #{tpu_custom_call.1} parent=0 // pred_check
    _
  $region11: #{tpu_custom_call.1} parent=0 // pred_check_branch
    %14 = sbr.rel (0) target = $region13
  $region12: #{tpu_custom_call.1} parent=0 // pred_region
    _
  $region13: #{tpu_custom_call.1} parent=0 // pred_fallthru
    _
  // Predicated region
  $region14: #{tpu_custom_call.1} parent=0 // pred_check
    _
  $region15: #{tpu_custom_call.1} parent=0 // pred_check_branch
    %16 = sbr.rel (0) target = $region17
  $region16: #{tpu_custom_call.1} parent=0 // pred_region
    _
  $region17: #{tpu_custom_call.1} parent=0 // pred_fallthru
    _
  %v18 = vld [vmem:[%s0] sm:$0xf]
  %v19 = vld [vmem:[%s0 + $0x4] sm:$0xf]
  %v20 = vld [vmem:[%s0 + $0x8] sm:$0xf]
  %v21 = vld [vmem:[%s0 + $0xc] sm:$0xf]
  %v22 = vld [vmem:[%s0 + $0x10] sm:$0xf]
  %v23 = vld [vmem:[%s0 + $0x14] sm:$0xf]
  %v24 = vld [vmem:[%s0 + $0x18] sm:$0xf]
  %v25 = vld [vmem:[%s0 + $0x1c] sm:$0xf]
  %v26 = vld [vmem:[%s0 + $0x20] sm:$0xf]
  %v27 = vld [vmem:[%s0 + $0x24] sm:$0xf]
  %v28 = vld [vmem:[%s0 + $0x28] sm:$0xf]
  %v29 = vld [vmem:[%s0 + $0x2c] sm:$0xf]
  %v30 = vld [vmem:[%s0 + $0x30] sm:$0xf]
  %v31 = vld [vmem:[%s0 + $0x34] sm:$0xf]
  %v32 = vld [vmem:[%s0 + $0x38] sm:$0xf]
  %v33 = vld [vmem:[%s0 + $0x3c] sm:$0xf]
  %v34 = vld [vmem:[%s0 + $0x40] sm:$0xf]
  %v35 = vld [vmem:[%s0 + $0x44] sm:$0xf]
  %v36 = vld [vmem:[%s0 + $0x48] sm:$0xf]
  %v37 = vld [vmem:[%s0 + $0x4c] sm:$0xf]
  %v38 = vld [vmem:[%s0 + $0x50] sm:$0xf]
  %v39 = vld [vmem:[%s0 + $0x54] sm:$0xf]
  %v40 = vld [vmem:[%s0 + $0x58] sm:$0xf]
  %v41 = vld [vmem:[%s0 + $0x5c] sm:$0xf]
  %v42 = vld [vmem:[%s0 + $0x60] sm:$0xf]
  %v43 = vld [vmem:[%s0 + $0x64] sm:$0xf]
  %v44 = vld [vmem:[%s0 + $0x68] sm:$0xf]
  %v45 = vld [vmem:[%s0 + $0x6c] sm:$0xf]
  %v46 = vld [vmem:[%s0 + $0x70] sm:$0xf]
  %v47 = vld [vmem:[%s0 + $0x74] sm:$0xf]
  %v48 = vld [vmem:[%s0 + $0x78] sm:$0xf]
  %v49 = vld [vmem:[%s0 + $0x7c] sm:$0xf]
  %v50 = vld [vmem:[%s0 + $0x80] sm:$0xf]
  %v51 = vld [vmem:[%s0 + $0x84] sm:$0xf]
  %v52 = vld [vmem:[%s0 + $0x88] sm:$0xf]
  %v53 = vld [vmem:[%s0 + $0x8c] sm:$0xf]
  %v54 = vld [vmem:[%s0 + $0x90] sm:$0xf]
  %v55 = vld [vmem:[%s0 + $0x94] sm:$0xf]
  %v56 = vld [vmem:[%s0 + $0x98] sm:$0xf]
  %v57 = vld [vmem:[%s0 + $0x9c] sm:$0xf]
  %v58 = vld [vmem:[%s0 + $0xa0] sm:$0xf]
  %v59 = vld [vmem:[%s0 + $0xa4] sm:$0xf]
  %v60 = vld [vmem:[%s0 + $0xa8] sm:$0xf]
  %v61 = vld [vmem:[%s0 + $0xac] sm:$0xf]
  %v62 = vld [vmem:[%s0 + $0xb0] sm:$0xf]
  %v63 = vld [vmem:[%s0 + $0xb4] sm:$0xf]
  %v64 = vld [vmem:[%s0 + $0xb8] sm:$0xf]
  %v65 = vld [vmem:[%s0 + $0xbc] sm:$0xf]
  %v66 = vld [vmem:[%s0 + $0xc0] sm:$0xf]
  %v67 = vld [vmem:[%s0 + $0xc4] sm:$0xf]
  %v68 = vld [vmem:[%s0 + $0xc8] sm:$0xf]
  %v69 = vld [vmem:[%s0 + $0xcc] sm:$0xf]
  %v70 = vld [vmem:[%s0 + $0xd0] sm:$0xf]
  %v71 = vld [vmem:[%s0 + $0xd4] sm:$0xf]
  %v72 = vld [vmem:[%s0 + $0xd8] sm:$0xf]
  %v73 = vld [vmem:[%s0 + $0xdc] sm:$0xf]
  %v74 = vld [vmem:[%s0 + $0xe0] sm:$0xf]
  %v75 = vld [vmem:[%s0 + $0xe4] sm:$0xf]
  %v76 = vld [vmem:[%s0 + $0xe8] sm:$0xf]
  %v77 = vld [vmem:[%s0 + $0xec] sm:$0xf]
  %v78 = vld [vmem:[%s0 + $0xf0] sm:$0xf]
  %v79 = vld [vmem:[%s0 + $0xf4] sm:$0xf]
  %v80 = vld [vmem:[%s0 + $0xf8] sm:$0xf]
  %v81 = vld [vmem:[%s0 + $0xfc] sm:$0xf]
  %v82 = vld [vmem:[%s1] sm:$0x3]
  %v147 = vunpack.c.l.b16 %v18
  %v148 = vunpack.c.l.b16 %v19
  %v149 = vunpack.c.l.b16 %v20
  %v150 = vunpack.c.l.b16 %v21
  %v151 = vunpack.c.l.b16 %v22
  %v152 = vunpack.c.l.b16 %v23
  %v153 = vunpack.c.l.b16 %v24
  %v154 = vunpack.c.l.b16 %v25
  %v155 = vunpack.c.l.b16 %v26
  %v156 = vunpack.c.l.b16 %v27
  %v157 = vunpack.c.l.b16 %v28
  %v158 = vunpack.c.l.b16 %v29
  %v159 = vunpack.c.l.b16 %v30
  %v160 = vunpack.c.l.b16 %v31
  %v161 = vunpack.c.l.b16 %v32
  %v162 = vunpack.c.l.b16 %v33
  %v163 = vunpack.c.l.b16 %v34
  %v164 = vunpack.c.l.b16 %v35
  %v165 = vunpack.c.l.b16 %v36
  %v166 = vunpack.c.l.b16 %v37
  %v167 = vunpack.c.l.b16 %v38
  %v168 = vunpack.c.l.b16 %v39
  %v169 = vunpack.c.l.b16 %v40
  %v170 = vunpack.c.l.b16 %v41
  %v171 = vunpack.c.l.b16 %v42
  %v172 = vunpack.c.l.b16 %v43
  %v173 = vunpack.c.l.b16 %v44
  %v174 = vunpack.c.l.b16 %v45
  %v175 = vunpack.c.l.b16 %v46
  %v176 = vunpack.c.l.b16 %v47
  %v177 = vunpack.c.l.b16 %v48
  %v178 = vunpack.c.l.b16 %v49
  %v179 = vunpack.c.l.b16 %v50
  %v180 = vunpack.c.l.b16 %v51
  %v181 = vunpack.c.l.b16 %v52
  %v182 = vunpack.c.l.b16 %v53
  %v183 = vunpack.c.l.b16 %v54
  %v184 = vunpack.c.l.b16 %v55
  %v185 = vunpack.c.l.b16 %v56
  %v186 = vunpack.c.l.b16 %v57
  %v187 = vunpack.c.l.b16 %v58
  %v188 = vunpack.c.l.b16 %v59
  %v189 = vunpack.c.l.b16 %v60
  %v190 = vunpack.c.l.b16 %v61
  %v191 = vunpack.c.l.b16 %v62
  %v192 = vunpack.c.l.b16 %v63
  %v193 = vunpack.c.l.b16 %v64
  %v194 = vunpack.c.l.b16 %v65
  %v195 = vunpack.c.l.b16 %v66
  %v196 = vunpack.c.l.b16 %v67
  %v197 = vunpack.c.l.b16 %v68
  %v198 = vunpack.c.l.b16 %v69
  %v199 = vunpack.c.l.b16 %v70
  %v200 = vunpack.c.l.b16 %v71
  %v201 = vunpack.c.l.b16 %v72
  %v202 = vunpack.c.l.b16 %v73
  %v203 = vunpack.c.l.b16 %v74
  %v204 = vunpack.c.l.b16 %v75
  %v205 = vunpack.c.l.b16 %v76
  %v206 = vunpack.c.l.b16 %v77
  %v207 = vunpack.c.l.b16 %v78
  %v208 = vunpack.c.l.b16 %v79
  %v209 = vunpack.c.l.b16 %v80
  %v210 = vunpack.c.l.b16 %v81
  %v211 = vpack.c.b16 %v148, %v147
  %v212 = vpack.c.b16 %v150, %v149
  %v213 = vpack.c.b16 %v152, %v151
  %v214 = vpack.c.b16 %v154, %v153
  %v215 = vpack.c.b16 %v156, %v155
  %v216 = vpack.c.b16 %v158, %v157
  %v217 = vpack.c.b16 %v160, %v159
  %v218 = vpack.c.b16 %v162, %v161
  %v219 = vpack.c.b16 %v164, %v163
  %v220 = vpack.c.b16 %v166, %v165
  %v221 = vpack.c.b16 %v168, %v167
  %v222 = vpack.c.b16 %v170, %v169
  %v223 = vpack.c.b16 %v172, %v171
  %v224 = vpack.c.b16 %v174, %v173
  %v225 = vpack.c.b16 %v176, %v175
  %v226 = vpack.c.b16 %v178, %v177
  %v227 = vpack.c.b16 %v180, %v179
  %v228 = vpack.c.b16 %v182, %v181
  %v229 = vpack.c.b16 %v184, %v183
  %v230 = vpack.c.b16 %v186, %v185
  %v231 = vpack.c.b16 %v188, %v187
  %v232 = vpack.c.b16 %v190, %v189
  %v233 = vpack.c.b16 %v192, %v191
  %v234 = vpack.c.b16 %v194, %v193
  %v235 = vpack.c.b16 %v196, %v195
  %v236 = vpack.c.b16 %v198, %v197
  %v237 = vpack.c.b16 %v200, %v199
  %v238 = vpack.c.b16 %v202, %v201
  %v239 = vpack.c.b16 %v204, %v203
  %v240 = vpack.c.b16 %v206, %v205
  %v241 = vpack.c.b16 %v208, %v207
  %v242 = vpack.c.b16 %v210, %v209
  %vm243 = vcmask 31744
  %v245 = vsel %vm243, %v211, 0
  %v248 = vsel %vm243, %v212, 0
  %v251 = vsel %vm243, %v213, 0
  %v254 = vsel %vm243, %v214, 0
  %v257 = vsel %vm243, %v215, 0
  %v260 = vsel %vm243, %v216, 0
  %v263 = vsel %vm243, %v217, 0
  %v266 = vsel %vm243, %v218, 0
  %v269 = vsel %vm243, %v219, 0
  %v272 = vsel %vm243, %v220, 0
  %v275 = vsel %vm243, %v221, 0
  %v278 = vsel %vm243, %v222, 0
  %v281 = vsel %vm243, %v223, 0
  %v284 = vsel %vm243, %v224, 0
  %v287 = vsel %vm243, %v225, 0
  %v290 = vsel %vm243, %v226, 0
  %v293 = vsel %vm243, %v227, 0
  %v296 = vsel %vm243, %v228, 0
  %v299 = vsel %vm243, %v229, 0
  %v302 = vsel %vm243, %v230, 0
  %v305 = vsel %vm243, %v231, 0
  %v308 = vsel %vm243, %v232, 0
  %v311 = vsel %vm243, %v233, 0
  %v314 = vsel %vm243, %v234, 0
  %v317 = vsel %vm243, %v235, 0
  %v320 = vsel %vm243, %v236, 0
  %v323 = vsel %vm243, %v237, 0
  %v326 = vsel %vm243, %v238, 0
  %v329 = vsel %vm243, %v239, 0
  %v332 = vsel %vm243, %v240, 0
  %v335 = vsel %vm243, %v241, 0
  %v338 = vsel %vm243, %v242, 0
  %vm340 = vcmask 1041408
  %v342 = vsel %vm340, %v82, 0
  %344 = vmatprep.subr.bf16.mxu0 0
  %345 = vmatpush1.bf16.msra.mxu0 0
  %346 = vmatprep.subr.bf16.mxu0 0
  %347 = vmatpush1.bf16.msra.mxu0 0
  %348 = vmatprep.subr.bf16.mxu0 0
  %349 = vmatpush1.bf16.msra.mxu0 0
  %350 = vmatprep.subr.bf16.mxu0 0
  %351 = vmatpush1.bf16.msra.mxu0 0
  %352 = vmatprep.subr.bf16.mxu0 0
  %353 = vmatpush1.bf16.msra.mxu0 0
  %354 = vmatprep.subr.bf16.mxu0 0
  %355 = vmatpush1.bf16.msra.mxu0 0
  %356 = vmatprep.subr.bf16.mxu0 0
  %357 = vmatpush1.bf16.msra.mxu0 0
  %358 = vmatprep.subr.bf16.mxu0 0
  %359 = vmatpush1.bf16.msra.mxu0 %v342
  %360 = vmatprep.subr.bf16.mxu0 0
  %361 = vmatpush2.bf16.msra.mxu0 0
  %362 = vmatprep.subr.bf16.mxu0 0
  %363 = vmatpush2.bf16.msra.mxu0 0
  %364 = vmatprep.subr.bf16.mxu0 0
  %365 = vmatpush2.bf16.msra.mxu0 0
  %366 = vmatprep.subr.bf16.mxu0 0
  %367 = vmatpush2.bf16.msra.mxu0 0
  %368 = vmatprep.subr.bf16.mxu0 0
  %369 = vmatpush2.bf16.msra.mxu0 0
  %370 = vmatprep.subr.bf16.mxu0 0
  %371 = vmatpush2.bf16.msra.mxu0 0
  %372 = vmatprep.subr.bf16.mxu0 0
  %373 = vmatpush2.bf16.msra.mxu0 0
  %374 = vmatprep.subr.bf16.mxu0 0
  %375 = vmatpush2.bf16.msra.mxu0 0
  %376 = vmatprep.mubr.bf16.mxu0 0
  %377 = vmatmul.mubr.bf16.gmra.mxu0 %v245
  %v378 = vpop.f32.mrf.mxu0
  %v379 = vadd.f32 0.0, %v378
  %v380 = vpop.f32.mrf.mxu0
  %v381 = vpop.f32.mrf.mxu0
  %v382 = vadd.f32 0.0, %v381
  %v383 = vpop.f32.mrf.mxu0
  %384 = vmatprep.mubr.bf16.mxu0 0
  %385 = vmatmul.mubr.bf16.gmra.mxu0 %v248
  %v386 = vpop.f32.mrf.mxu0
  %v387 = vadd.f32 0.0, %v386
  %v388 = vpop.f32.mrf.mxu0
  %v389 = vpop.f32.mrf.mxu0
  %v390 = vadd.f32 0.0, %v389
  %v391 = vpop.f32.mrf.mxu0
  %392 = vmatprep.mubr.bf16.mxu0 0
  %393 = vmatmul.mubr.bf16.gmra.mxu0 %v251
  %v394 = vpop.f32.mrf.mxu0
  %v395 = vadd.f32 0.0, %v394
  %v396 = vpop.f32.mrf.mxu0
  %v397 = vpop.f32.mrf.mxu0
  %v398 = vadd.f32 0.0, %v397
  %v399 = vpop.f32.mrf.mxu0
  %400 = vmatprep.mubr.bf16.mxu0 0
  %401 = vmatmul.mubr.bf16.gmra.mxu0 %v254
  %v402 = vpop.f32.mrf.mxu0
  %v403 = vadd.f32 0.0, %v402
  %v404 = vpop.f32.mrf.mxu0
  %v405 = vpop.f32.mrf.mxu0
  %v406 = vadd.f32 0.0, %v405
  %v407 = vpop.f32.mrf.mxu0
  %408 = vmatprep.mubr.bf16.mxu0 0
  %409 = vmatmul.mubr.bf16.gmra.mxu0 %v257
  %v410 = vpop.f32.mrf.mxu0
  %v411 = vadd.f32 0.0, %v410
  %v412 = vpop.f32.mrf.mxu0
  %v413 = vpop.f32.mrf.mxu0
  %v414 = vadd.f32 0.0, %v413
  %v415 = vpop.f32.mrf.mxu0
  %416 = vmatprep.mubr.bf16.mxu0 0
  %417 = vmatmul.mubr.bf16.gmra.mxu0 %v260
  %v418 = vpop.f32.mrf.mxu0
  %v419 = vadd.f32 0.0, %v418
  %v420 = vpop.f32.mrf.mxu0
  %v421 = vpop.f32.mrf.mxu0
  %v422 = vadd.f32 0.0, %v421
  %v423 = vpop.f32.mrf.mxu0
  %424 = vmatprep.mubr.bf16.mxu0 0
  %425 = vmatmul.mubr.bf16.gmra.mxu0 %v263
  %v426 = vpop.f32.mrf.mxu0
  %v427 = vadd.f32 0.0, %v426
  %v428 = vpop.f32.mrf.mxu0
  %v429 = vpop.f32.mrf.mxu0
  %v430 = vadd.f32 0.0, %v429
  %v431 = vpop.f32.mrf.mxu0
  %432 = vmatprep.mubr.bf16.mxu0 0
  %433 = vmatmul.mubr.bf16.gmra.mxu0 %v266
  %v434 = vpop.f32.mrf.mxu0
  %v435 = vadd.f32 0.0, %v434
  %v436 = vpop.f32.mrf.mxu0
  %v437 = vpop.f32.mrf.mxu0
  %v438 = vadd.f32 0.0, %v437
  %v439 = vpop.f32.mrf.mxu0
  %440 = vmatprep.mubr.bf16.mxu0 0
  %441 = vmatmul.mubr.bf16.gmra.mxu0 %v269
  %v442 = vpop.f32.mrf.mxu0
  %v443 = vadd.f32 0.0, %v442
  %v444 = vpop.f32.mrf.mxu0
  %v445 = vpop.f32.mrf.mxu0
  %v446 = vadd.f32 0.0, %v445
  %v447 = vpop.f32.mrf.mxu0
  %448 = vmatprep.mubr.bf16.mxu0 0
  %449 = vmatmul.mubr.bf16.gmra.mxu0 %v272
  %v450 = vpop.f32.mrf.mxu0
  %v451 = vadd.f32 0.0, %v450
  %v452 = vpop.f32.mrf.mxu0
  %v453 = vpop.f32.mrf.mxu0
  %v454 = vadd.f32 0.0, %v453
  %v455 = vpop.f32.mrf.mxu0
  %456 = vmatprep.mubr.bf16.mxu0 0
  %457 = vmatmul.mubr.bf16.gmra.mxu0 %v275
  %v458 = vpop.f32.mrf.mxu0
  %v459 = vadd.f32 0.0, %v458
  %v460 = vpop.f32.mrf.mxu0
  %v461 = vpop.f32.mrf.mxu0
  %v462 = vadd.f32 0.0, %v461
  %v463 = vpop.f32.mrf.mxu0
  %464 = vmatprep.mubr.bf16.mxu0 0
  %465 = vmatmul.mubr.bf16.gmra.mxu0 %v278
  %v466 = vpop.f32.mrf.mxu0
  %v467 = vadd.f32 0.0, %v466
  %v468 = vpop.f32.mrf.mxu0
  %v469 = vpop.f32.mrf.mxu0
  %v470 = vadd.f32 0.0, %v469
  %v471 = vpop.f32.mrf.mxu0
  %472 = vmatprep.mubr.bf16.mxu0 0
  %473 = vmatmul.mubr.bf16.gmra.mxu0 %v281
  %v474 = vpop.f32.mrf.mxu0
  %v475 = vadd.f32 0.0, %v474
  %v476 = vpop.f32.mrf.mxu0
  %v477 = vpop.f32.mrf.mxu0
  %v478 = vadd.f32 0.0, %v477
  %v479 = vpop.f32.mrf.mxu0
  %480 = vmatprep.mubr.bf16.mxu0 0
  %481 = vmatmul.mubr.bf16.gmra.mxu0 %v284
  %v482 = vpop.f32.mrf.mxu0
  %v483 = vadd.f32 0.0, %v482
  %v484 = vpop.f32.mrf.mxu0
  %v485 = vpop.f32.mrf.mxu0
  %v486 = vadd.f32 0.0, %v485
  %v487 = vpop.f32.mrf.mxu0
  %488 = vmatprep.mubr.bf16.mxu0 0
  %489 = vmatmul.mubr.bf16.gmra.mxu0 %v287
  %v490 = vpop.f32.mrf.mxu0
  %v491 = vadd.f32 0.0, %v490
  %v492 = vpop.f32.mrf.mxu0
  %v493 = vpop.f32.mrf.mxu0
  %v494 = vadd.f32 0.0, %v493
  %v495 = vpop.f32.mrf.mxu0
  %496 = vmatprep.mubr.bf16.mxu0 0
  %497 = vmatmul.mubr.bf16.gmra.mxu0 %v290
  %v498 = vpop.f32.mrf.mxu0
  %v499 = vadd.f32 0.0, %v498
  %v500 = vpop.f32.mrf.mxu0
  %v501 = vpop.f32.mrf.mxu0
  %v502 = vadd.f32 0.0, %v501
  %v503 = vpop.f32.mrf.mxu0
  %504 = vmatprep.mubr.bf16.mxu0 0
  %505 = vmatmul.mubr.bf16.gmra.mxu0 %v293
  %v506 = vpop.f32.mrf.mxu0
  %v507 = vadd.f32 0.0, %v506
  %v508 = vpop.f32.mrf.mxu0
  %v509 = vpop.f32.mrf.mxu0
  %v510 = vadd.f32 0.0, %v509
  %v511 = vpop.f32.mrf.mxu0
  %512 = vmatprep.mubr.bf16.mxu0 0
  %513 = vmatmul.mubr.bf16.gmra.mxu0 %v296
  %v514 = vpop.f32.mrf.mxu0
  %v515 = vadd.f32 0.0, %v514
  %v516 = vpop.f32.mrf.mxu0
  %v517 = vpop.f32.mrf.mxu0
  %v518 = vadd.f32 0.0, %v517
  %v519 = vpop.f32.mrf.mxu0
  %520 = vmatprep.mubr.bf16.mxu0 0
  %521 = vmatmul.mubr.bf16.gmra.mxu0 %v299
  %v522 = vpop.f32.mrf.mxu0
  %v523 = vadd.f32 0.0, %v522
  %v524 = vpop.f32.mrf.mxu0
  %v525 = vpop.f32.mrf.mxu0
  %v526 = vadd.f32 0.0, %v525
  %v527 = vpop.f32.mrf.mxu0
  %528 = vmatprep.mubr.bf16.mxu0 0
  %529 = vmatmul.mubr.bf16.gmra.mxu0 %v302
  %v530 = vpop.f32.mrf.mxu0
  %v531 = vadd.f32 0.0, %v530
  %v532 = vpop.f32.mrf.mxu0
  %v533 = vpop.f32.mrf.mxu0
  %v534 = vadd.f32 0.0, %v533
  %v535 = vpop.f32.mrf.mxu0
  %536 = vmatprep.mubr.bf16.mxu0 0
  %537 = vmatmul.mubr.bf16.gmra.mxu0 %v305
  %v538 = vpop.f32.mrf.mxu0
  %v539 = vadd.f32 0.0, %v538
  %v540 = vpop.f32.mrf.mxu0
  %v541 = vpop.f32.mrf.mxu0
  %v542 = vadd.f32 0.0, %v541
  %v543 = vpop.f32.mrf.mxu0
  %544 = vmatprep.mubr.bf16.mxu0 0
  %545 = vmatmul.mubr.bf16.gmra.mxu0 %v308
  %v546 = vpop.f32.mrf.mxu0
  %v547 = vadd.f32 0.0, %v546
  %v548 = vpop.f32.mrf.mxu0
  %v549 = vpop.f32.mrf.mxu0
  %v550 = vadd.f32 0.0, %v549
  %v551 = vpop.f32.mrf.mxu0
  %552 = vmatprep.mubr.bf16.mxu0 0
  %553 = vmatmul.mubr.bf16.gmra.mxu0 %v311
  %v554 = vpop.f32.mrf.mxu0
  %v555 = vadd.f32 0.0, %v554
  %v556 = vpop.f32.mrf.mxu0
  %v557 = vpop.f32.mrf.mxu0
  %v558 = vadd.f32 0.0, %v557
  %v559 = vpop.f32.mrf.mxu0
  %560 = vmatprep.mubr.bf16.mxu0 0
  %561 = vmatmul.mubr.bf16.gmra.mxu0 %v314
  %v562 = vpop.f32.mrf.mxu0
  %v563 = vadd.f32 0.0, %v562
  %v564 = vpop.f32.mrf.mxu0
  %v565 = vpop.f32.mrf.mxu0
  %v566 = vadd.f32 0.0, %v565
  %v567 = vpop.f32.mrf.mxu0
  %568 = vmatprep.mubr.bf16.mxu0 0
  %569 = vmatmul.mubr.bf16.gmra.mxu0 %v317
  %v570 = vpop.f32.mrf.mxu0
  %v571 = vadd.f32 0.0, %v570
  %v572 = vpop.f32.mrf.mxu0
  %v573 = vpop.f32.mrf.mxu0
  %v574 = vadd.f32 0.0, %v573
  %v575 = vpop.f32.mrf.mxu0
  %576 = vmatprep.mubr.bf16.mxu0 0
  %577 = vmatmul.mubr.bf16.gmra.mxu0 %v320
  %v578 = vpop.f32.mrf.mxu0
  %v579 = vadd.f32 0.0, %v578
  %v580 = vpop.f32.mrf.mxu0
  %v581 = vpop.f32.mrf.mxu0
  %v582 = vadd.f32 0.0, %v581
  %v583 = vpop.f32.mrf.mxu0
  %584 = vmatprep.mubr.bf16.mxu0 0
  %585 = vmatmul.mubr.bf16.gmra.mxu0 %v323
  %v586 = vpop.f32.mrf.mxu0
  %v587 = vadd.f32 0.0, %v586
  %v588 = vpop.f32.mrf.mxu0
  %v589 = vpop.f32.mrf.mxu0
  %v590 = vadd.f32 0.0, %v589
  %v591 = vpop.f32.mrf.mxu0
  %592 = vmatprep.mubr.bf16.mxu0 0
  %593 = vmatmul.mubr.bf16.gmra.mxu0 %v326
  %v594 = vpop.f32.mrf.mxu0
  %v595 = vadd.f32 0.0, %v594
  %v596 = vpop.f32.mrf.mxu0
  %v597 = vpop.f32.mrf.mxu0
  %v598 = vadd.f32 0.0, %v597
  %v599 = vpop.f32.mrf.mxu0
  %600 = vmatprep.mubr.bf16.mxu0 0
  %601 = vmatmul.mubr.bf16.gmra.mxu0 %v329
  %v602 = vpop.f32.mrf.mxu0
  %v603 = vadd.f32 0.0, %v602
  %v604 = vpop.f32.mrf.mxu0
  %v605 = vpop.f32.mrf.mxu0
  %v606 = vadd.f32 0.0, %v605
  %v607 = vpop.f32.mrf.mxu0
  %608 = vmatprep.mubr.bf16.mxu0 0
  %609 = vmatmul.mubr.bf16.gmra.mxu0 %v332
  %v610 = vpop.f32.mrf.mxu0
  %v611 = vadd.f32 0.0, %v610
  %v612 = vpop.f32.mrf.mxu0
  %v613 = vpop.f32.mrf.mxu0
  %v614 = vadd.f32 0.0, %v613
  %v615 = vpop.f32.mrf.mxu0
  %616 = vmatprep.mubr.bf16.mxu0 0
  %617 = vmatmul.mubr.bf16.gmra.mxu0 %v335
  %v618 = vpop.f32.mrf.mxu0
  %v619 = vadd.f32 0.0, %v618
  %v620 = vpop.f32.mrf.mxu0
  %v621 = vpop.f32.mrf.mxu0
  %v622 = vadd.f32 0.0, %v621
  %v623 = vpop.f32.mrf.mxu0
  %624 = vmatprep.mubr.bf16.mxu0 0
  %625 = vmatmul.mubr.bf16.gmra.mxu0 %v338
  %v626 = vpop.f32.mrf.mxu0
  %v627 = vadd.f32 0.0, %v626
  %v628 = vpop.f32.mrf.mxu0
  %v629 = vpop.f32.mrf.mxu0
  %v630 = vadd.f32 0.0, %v629
  %v631 = vpop.f32.mrf.mxu0
  %632 = vdwg.mxu0
  %v633 = vld [vmem:[%s2] sm:$0x1]
  %v635 = vlaneseq
  %v636 = vshrl.u32 %v635, 7
  %v637 = vsub.s32 0, %v636
  %v638 = vrot.slane %v633, %v637
  %v640 = vmul.f32 %v379, %v638
  %v641 = vmul.f32 %v382, %v638
  %v642 = vmul.f32 %v387, %v638
  %v643 = vmul.f32 %v390, %v638
  %v644 = vmul.f32 %v395, %v638
  %v645 = vmul.f32 %v398, %v638
  %v646 = vmul.f32 %v403, %v638
  %v647 = vmul.f32 %v406, %v638
  %v648 = vmul.f32 %v411, %v638
  %v649 = vmul.f32 %v414, %v638
  %v650 = vmul.f32 %v419, %v638
  %v651 = vmul.f32 %v422, %v638
  %v652 = vmul.f32 %v427, %v638
  %v653 = vmul.f32 %v430, %v638
  %v654 = vmul.f32 %v435, %v638
  %v655 = vmul.f32 %v438, %v638
  %v656 = vmul.f32 %v443, %v638
  %v657 = vmul.f32 %v446, %v638
  %v658 = vmul.f32 %v451, %v638
  %v659 = vmul.f32 %v454, %v638
  %v660 = vmul.f32 %v459, %v638
  %v661 = vmul.f32 %v462, %v638
  %v662 = vmul.f32 %v467, %v638
  %v663 = vmul.f32 %v470, %v638
  %v664 = vmul.f32 %v475, %v638
  %v665 = vmul.f32 %v478, %v638
  %v666 = vmul.f32 %v483, %v638
  %v667 = vmul.f32 %v486, %v638
  %v668 = vmul.f32 %v491, %v638
  %v669 = vmul.f32 %v494, %v638
  %v670 = vmul.f32 %v499, %v638
  %v671 = vmul.f32 %v502, %v638
  %v672 = vmul.f32 %v507, %v638
  %v673 = vmul.f32 %v510, %v638
  %v674 = vmul.f32 %v515, %v638
  %v675 = vmul.f32 %v518, %v638
  %v676 = vmul.f32 %v523, %v638
  %v677 = vmul.f32 %v526, %v638
  %v678 = vmul.f32 %v531, %v638
  %v679 = vmul.f32 %v534, %v638
  %v680 = vmul.f32 %v539, %v638
  %v681 = vmul.f32 %v542, %v638
  %v682 = vmul.f32 %v547, %v638
  %v683 = vmul.f32 %v550, %v638
  %v684 = vmul.f32 %v555, %v638
  %v685 = vmul.f32 %v558, %v638
  %v686 = vmul.f32 %v563, %v638
  %v687 = vmul.f32 %v566, %v638
  %v688 = vmul.f32 %v571, %v638
  %v689 = vmul.f32 %v574, %v638
  %v690 = vmul.f32 %v579, %v638
  %v691 = vmul.f32 %v582, %v638
  %v692 = vmul.f32 %v587, %v638
  %v693 = vmul.f32 %v590, %v638
  %v694 = vmul.f32 %v595, %v638
  %v695 = vmul.f32 %v598, %v638
  %v696 = vmul.f32 %v603, %v638
  %v697 = vmul.f32 %v606, %v638
  %v698 = vmul.f32 %v611, %v638
  %v699 = vmul.f32 %v614, %v638
  %v700 = vmul.f32 %v619, %v638
  %v701 = vmul.f32 %v622, %v638
  %v702 = vmul.f32 %v627, %v638
  %v703 = vmul.f32 %v630, %v638
  %v704 = vld [vmem:[%s3] sm:$0x1]
  %v706 = vlaneseq
  %v707 = vshrl.u32 %v706, 7
  %v708 = vsub.s32 0, %v707
  %v709 = vrot.slane %v704, %v708
  %v711 = vadd.f32 %v640, %v709
  %v712 = vadd.f32 %v641, %v709
  %v713 = vadd.f32 %v642, %v709
  %v714 = vadd.f32 %v643, %v709
  %v715 = vadd.f32 %v644, %v709
  %v716 = vadd.f32 %v645, %v709
  %v717 = vadd.f32 %v646, %v709
  %v718 = vadd.f32 %v647, %v709
  %v719 = vadd.f32 %v648, %v709
  %v720 = vadd.f32 %v649, %v709
  %v721 = vadd.f32 %v650, %v709
  %v722 = vadd.f32 %v651, %v709
  %v723 = vadd.f32 %v652, %v709
  %v724 = vadd.f32 %v653, %v709
  %v725 = vadd.f32 %v654, %v709
  %v726 = vadd.f32 %v655, %v709
  %v727 = vadd.f32 %v656, %v709
  %v728 = vadd.f32 %v657, %v709
  %v729 = vadd.f32 %v658, %v709
  %v730 = vadd.f32 %v659, %v709
  %v731 = vadd.f32 %v660, %v709
  %v732 = vadd.f32 %v661, %v709
  %v733 = vadd.f32 %v662, %v709
  %v734 = vadd.f32 %v663, %v709
  %v735 = vadd.f32 %v664, %v709
  %v736 = vadd.f32 %v665, %v709
  %v737 = vadd.f32 %v666, %v709
  %v738 = vadd.f32 %v667, %v709
  %v739 = vadd.f32 %v668, %v709
  %v740 = vadd.f32 %v669, %v709
  %v741 = vadd.f32 %v670, %v709
  %v742 = vadd.f32 %v671, %v709
  %v743 = vadd.f32 %v672, %v709
  %v744 = vadd.f32 %v673, %v709
  %v745 = vadd.f32 %v674, %v709
  %v746 = vadd.f32 %v675, %v709
  %v747 = vadd.f32 %v676, %v709
  %v748 = vadd.f32 %v677, %v709
  %v749 = vadd.f32 %v678, %v709
  %v750 = vadd.f32 %v679, %v709
  %v751 = vadd.f32 %v680, %v709
  %v752 = vadd.f32 %v681, %v709
  %v753 = vadd.f32 %v682, %v709
  %v754 = vadd.f32 %v683, %v709
  %v755 = vadd.f32 %v684, %v709
  %v756 = vadd.f32 %v685, %v709
  %v757 = vadd.f32 %v686, %v709
  %v758 = vadd.f32 %v687, %v709
  %v759 = vadd.f32 %v688, %v709
  %v760 = vadd.f32 %v689, %v709
  %v761 = vadd.f32 %v690, %v709
  %v762 = vadd.f32 %v691, %v709
  %v763 = vadd.f32 %v692, %v709
  %v764 = vadd.f32 %v693, %v709
  %v765 = vadd.f32 %v694, %v709
  %v766 = vadd.f32 %v695, %v709
  %v767 = vadd.f32 %v696, %v709
  %v768 = vadd.f32 %v697, %v709
  %v769 = vadd.f32 %v698, %v709
  %v770 = vadd.f32 %v699, %v709
  %v771 = vadd.f32 %v700, %v709
  %v772 = vadd.f32 %v701, %v709
  %v773 = vadd.f32 %v702, %v709
  %v774 = vadd.f32 %v703, %v709
  %v775 = vmax.f32 %v711, 0.0
  %v776 = vmax.f32 %v712, 0.0
  %v777 = vmax.f32 %v713, 0.0
  %v778 = vmax.f32 %v714, 0.0
  %v779 = vmax.f32 %v715, 0.0
  %v780 = vmax.f32 %v716, 0.0
  %v781 = vmax.f32 %v717, 0.0
  %v782 = vmax.f32 %v718, 0.0
  %v783 = vmax.f32 %v719, 0.0
  %v784 = vmax.f32 %v720, 0.0
  %v785 = vmax.f32 %v721, 0.0
  %v786 = vmax.f32 %v722, 0.0
  %v787 = vmax.f32 %v723, 0.0
  %v788 = vmax.f32 %v724, 0.0
  %v789 = vmax.f32 %v725, 0.0
  %v790 = vmax.f32 %v726, 0.0
  %v791 = vmax.f32 %v727, 0.0
  %v792 = vmax.f32 %v728, 0.0
  %v793 = vmax.f32 %v729, 0.0
  %v794 = vmax.f32 %v730, 0.0
  %v795 = vmax.f32 %v731, 0.0
  %v796 = vmax.f32 %v732, 0.0
  %v797 = vmax.f32 %v733, 0.0
  %v798 = vmax.f32 %v734, 0.0
  %v799 = vmax.f32 %v735, 0.0
  %v800 = vmax.f32 %v736, 0.0
  %v801 = vmax.f32 %v737, 0.0
  %v802 = vmax.f32 %v738, 0.0
  %v803 = vmax.f32 %v739, 0.0
  %v804 = vmax.f32 %v740, 0.0
  %v805 = vmax.f32 %v741, 0.0
  %v806 = vmax.f32 %v742, 0.0
  %v807 = vmax.f32 %v743, 0.0
  %v808 = vmax.f32 %v744, 0.0
  %v809 = vmax.f32 %v745, 0.0
  %v810 = vmax.f32 %v746, 0.0
  %v811 = vmax.f32 %v747, 0.0
  %v812 = vmax.f32 %v748, 0.0
  %v813 = vmax.f32 %v749, 0.0
  %v814 = vmax.f32 %v750, 0.0
  %v815 = vmax.f32 %v751, 0.0
  %v816 = vmax.f32 %v752, 0.0
  %v817 = vmax.f32 %v753, 0.0
  %v818 = vmax.f32 %v754, 0.0
  %v819 = vmax.f32 %v755, 0.0
  %v820 = vmax.f32 %v756, 0.0
  %v821 = vmax.f32 %v757, 0.0
  %v822 = vmax.f32 %v758, 0.0
  %v823 = vmax.f32 %v759, 0.0
  %v824 = vmax.f32 %v760, 0.0
  %v825 = vmax.f32 %v761, 0.0
  %v826 = vmax.f32 %v762, 0.0
  %v827 = vmax.f32 %v763, 0.0
  %v828 = vmax.f32 %v764, 0.0
  %v829 = vmax.f32 %v765, 0.0
  %v830 = vmax.f32 %v766, 0.0
  %v831 = vmax.f32 %v767, 0.0
  %v832 = vmax.f32 %v768, 0.0
  %v833 = vmax.f32 %v769, 0.0
  %v834 = vmax.f32 %v770, 0.0
  %v835 = vmax.f32 %v771, 0.0
  %v836 = vmax.f32 %v772, 0.0
  %v837 = vmax.f32 %v773, 0.0
  %v838 = vmax.f32 %v774, 0.0
  %v839 = vpack.c.bf16 %v776, %v775
  %v840 = vpack.c.bf16 %v778, %v777
  %v841 = vpack.c.bf16 %v780, %v779
  %v842 = vpack.c.bf16 %v782, %v781
  %v843 = vpack.c.bf16 %v784, %v783
  %v844 = vpack.c.bf16 %v786, %v785
  %v845 = vpack.c.bf16 %v788, %v787
  %v846 = vpack.c.bf16 %v790, %v789
  %v847 = vpack.c.bf16 %v792, %v791
  %v848 = vpack.c.bf16 %v794, %v793
  %v849 = vpack.c.bf16 %v796, %v795
  %v850 = vpack.c.bf16 %v798, %v797
  %v851 = vpack.c.bf16 %v800, %v799
  %v852 = vpack.c.bf16 %v802, %v801
  %v853 = vpack.c.bf16 %v804, %v803
  %v854 = vpack.c.bf16 %v806, %v805
  %v855 = vpack.c.bf16 %v808, %v807
  %v856 = vpack.c.bf16 %v810, %v809
  %v857 = vpack.c.bf16 %v812, %v811
  %v858 = vpack.c.bf16 %v814, %v813
  %v859 = vpack.c.bf16 %v816, %v815
  %v860 = vpack.c.bf16 %v818, %v817
  %v861 = vpack.c.bf16 %v820, %v819
  %v862 = vpack.c.bf16 %v822, %v821
  %v863 = vpack.c.bf16 %v824, %v823
  %v864 = vpack.c.bf16 %v826, %v825
  %v865 = vpack.c.bf16 %v828, %v827
  %v866 = vpack.c.bf16 %v830, %v829
  %v867 = vpack.c.bf16 %v832, %v831
  %v868 = vpack.c.bf16 %v834, %v833
  %v869 = vpack.c.bf16 %v836, %v835
  %v870 = vpack.c.bf16 %v838, %v837
  %v903 = vunpack.c.l.b16 %v839
  %v904 = vunpack.c.h.b16 %v839
  %v905 = vunpack.c.l.b16 %v840
  %v906 = vunpack.c.h.b16 %v840
  %v907 = vunpack.c.l.b16 %v841
  %v908 = vunpack.c.h.b16 %v841
  %v909 = vunpack.c.l.b16 %v842
  %v910 = vunpack.c.h.b16 %v842
  %v911 = vunpack.c.l.b16 %v843
  %v912 = vunpack.c.h.b16 %v843
  %v913 = vunpack.c.l.b16 %v844
  %v914 = vunpack.c.h.b16 %v844
  %v915 = vunpack.c.l.b16 %v845
  %v916 = vunpack.c.h.b16 %v845
  %v917 = vunpack.c.l.b16 %v846
  %v918 = vunpack.c.h.b16 %v846
  %v919 = vunpack.c.l.b16 %v847
  %v920 = vunpack.c.h.b16 %v847
  %v921 = vunpack.c.l.b16 %v848
  %v922 = vunpack.c.h.b16 %v848
  %v923 = vunpack.c.l.b16 %v849
  %v924 = vunpack.c.h.b16 %v849
  %v925 = vunpack.c.l.b16 %v850
  %v926 = vunpack.c.h.b16 %v850
  %v927 = vunpack.c.l.b16 %v851
  %v928 = vunpack.c.h.b16 %v851
  %v929 = vunpack.c.l.b16 %v852
  %v930 = vunpack.c.h.b16 %v852
  %v931 = vunpack.c.l.b16 %v853
  %v932 = vunpack.c.h.b16 %v853
  %v933 = vunpack.c.l.b16 %v854
  %v934 = vunpack.c.h.b16 %v854
  %v935 = vunpack.c.l.b16 %v855
  %v936 = vunpack.c.h.b16 %v855
  %v937 = vunpack.c.l.b16 %v856
  %v938 = vunpack.c.h.b16 %v856
  %v939 = vunpack.c.l.b16 %v857
  %v940 = vunpack.c.h.b16 %v857
  %v941 = vunpack.c.l.b16 %v858
  %v942 = vunpack.c.h.b16 %v858
  %v943 = vunpack.c.l.b16 %v859
  %v944 = vunpack.c.h.b16 %v859
  %v945 = vunpack.c.l.b16 %v860
  %v946 = vunpack.c.h.b16 %v860
  %v947 = vunpack.c.l.b16 %v861
  %v948 = vunpack.c.h.b16 %v861
  %v949 = vunpack.c.l.b16 %v862
  %v950 = vunpack.c.h.b16 %v862
  %v951 = vunpack.c.l.b16 %v863
  %v952 = vunpack.c.h.b16 %v863
  %v953 = vunpack.c.l.b16 %v864
  %v954 = vunpack.c.h.b16 %v864
  %v955 = vunpack.c.l.b16 %v865
  %v956 = vunpack.c.h.b16 %v865
  %v957 = vunpack.c.l.b16 %v866
  %v958 = vunpack.c.h.b16 %v866
  %v959 = vunpack.c.l.b16 %v867
  %v960 = vunpack.c.h.b16 %v867
  %v961 = vunpack.c.l.b16 %v868
  %v962 = vunpack.c.h.b16 %v868
  %v963 = vunpack.c.l.b16 %v869
  %v964 = vunpack.c.h.b16 %v869
  %v965 = vunpack.c.l.b16 %v870
  %v966 = vunpack.c.h.b16 %v870
  %v967 = vpack.c.b16 %v903, %v903
  %v968 = vpack.c.b16 %v904, %v904
  %v969 = vpack.c.b16 %v905, %v905
  %v970 = vpack.c.b16 %v906, %v906
  %v971 = vpack.c.b16 %v907, %v907
  %v972 = vpack.c.b16 %v908, %v908
  %v973 = vpack.c.b16 %v909, %v909
  %v974 = vpack.c.b16 %v910, %v910
  %v975 = vpack.c.b16 %v911, %v911
  %v976 = vpack.c.b16 %v912, %v912
  %v977 = vpack.c.b16 %v913, %v913
  %v978 = vpack.c.b16 %v914, %v914
  %v979 = vpack.c.b16 %v915, %v915
  %v980 = vpack.c.b16 %v916, %v916
  %v981 = vpack.c.b16 %v917, %v917
  %v982 = vpack.c.b16 %v918, %v918
  %v983 = vpack.c.b16 %v919, %v919
  %v984 = vpack.c.b16 %v920, %v920
  %v985 = vpack.c.b16 %v921, %v921
  %v986 = vpack.c.b16 %v922, %v922
  %v987 = vpack.c.b16 %v923, %v923
  %v988 = vpack.c.b16 %v924, %v924
  %v989 = vpack.c.b16 %v925, %v925
  %v990 = vpack.c.b16 %v926, %v926
  %v991 = vpack.c.b16 %v927, %v927
  %v992 = vpack.c.b16 %v928, %v928
  %v993 = vpack.c.b16 %v929, %v929
  %v994 = vpack.c.b16 %v930, %v930
  %v995 = vpack.c.b16 %v931, %v931
  %v996 = vpack.c.b16 %v932, %v932
  %v997 = vpack.c.b16 %v933, %v933
  %v998 = vpack.c.b16 %v934, %v934
  %v999 = vpack.c.b16 %v935, %v935
  %v1000 = vpack.c.b16 %v936, %v936
  %v1001 = vpack.c.b16 %v937, %v937
  %v1002 = vpack.c.b16 %v938, %v938
  %v1003 = vpack.c.b16 %v939, %v939
  %v1004 = vpack.c.b16 %v940, %v940
  %v1005 = vpack.c.b16 %v941, %v941
  %v1006 = vpack.c.b16 %v942, %v942
  %v1007 = vpack.c.b16 %v943, %v943
  %v1008 = vpack.c.b16 %v944, %v944
  %v1009 = vpack.c.b16 %v945, %v945
  %v1010 = vpack.c.b16 %v946, %v946
  %v1011 = vpack.c.b16 %v947, %v947
  %v1012 = vpack.c.b16 %v948, %v948
  %v1013 = vpack.c.b16 %v949, %v949
  %v1014 = vpack.c.b16 %v950, %v950
  %v1015 = vpack.c.b16 %v951, %v951
  %v1016 = vpack.c.b16 %v952, %v952
  %v1017 = vpack.c.b16 %v953, %v953
  %v1018 = vpack.c.b16 %v954, %v954
  %v1019 = vpack.c.b16 %v955, %v955
  %v1020 = vpack.c.b16 %v956, %v956
  %v1021 = vpack.c.b16 %v957, %v957
  %v1022 = vpack.c.b16 %v958, %v958
  %v1023 = vpack.c.b16 %v959, %v959
  %v1024 = vpack.c.b16 %v960, %v960
  %v1025 = vpack.c.b16 %v961, %v961
  %v1026 = vpack.c.b16 %v962, %v962
  %v1027 = vpack.c.b16 %v963, %v963
  %v1028 = vpack.c.b16 %v964, %v964
  %v1029 = vpack.c.b16 %v965, %v965
  %v1030 = vpack.c.b16 %v966, %v966
  %vm1095 = vcmask 27648
  %1096 = vst.msk [vmem:[%s4] sm:$0xf] %vm1095, %v967
  %1097 = vst.msk [vmem:[%s4 + $0x4] sm:$0xf] %vm1095, %v968
  %1098 = vst.msk [vmem:[%s4 + $0x8] sm:$0xf] %vm1095, %v969
  %1099 = vst.msk [vmem:[%s4 + $0xc] sm:$0xf] %vm1095, %v970
  %1100 = vst.msk [vmem:[%s4 + $0x10] sm:$0xf] %vm1095, %v971
  %1101 = vst.msk [vmem:[%s4 + $0x14] sm:$0xf] %vm1095, %v972
  %1102 = vst.msk [vmem:[%s4 + $0x18] sm:$0xf] %vm1095, %v973
  %1103 = vst.msk [vmem:[%s4 + $0x1c] sm:$0xf] %vm1095, %v974
  %1104 = vst.msk [vmem:[%s4 + $0x20] sm:$0xf] %vm1095, %v975
  %1105 = vst.msk [vmem:[%s4 + $0x24] sm:$0xf] %vm1095, %v976
  %1106 = vst.msk [vmem:[%s4 + $0x28] sm:$0xf] %vm1095, %v977
  %1107 = vst.msk [vmem:[%s4 + $0x2c] sm:$0xf] %vm1095, %v978
  %1108 = vst.msk [vmem:[%s4 + $0x30] sm:$0xf] %vm1095, %v979
  %1109 = vst.msk [vmem:[%s4 + $0x34] sm:$0xf] %vm1095, %v980
  %1110 = vst.msk [vmem:[%s4 + $0x38] sm:$0xf] %vm1095, %v981
  %1111 = vst.msk [vmem:[%s4 + $0x3c] sm:$0xf] %vm1095, %v982
  %1112 = vst.msk [vmem:[%s4 + $0x40] sm:$0xf] %vm1095, %v983
  %1113 = vst.msk [vmem:[%s4 + $0x44] sm:$0xf] %vm1095, %v984
  %1114 = vst.msk [vmem:[%s4 + $0x48] sm:$0xf] %vm1095, %v985
  %1115 = vst.msk [vmem:[%s4 + $0x4c] sm:$0xf] %vm1095, %v986
  %1116 = vst.msk [vmem:[%s4 + $0x50] sm:$0xf] %vm1095, %v987
  %1117 = vst.msk [vmem:[%s4 + $0x54] sm:$0xf] %vm1095, %v988
  %1118 = vst.msk [vmem:[%s4 + $0x58] sm:$0xf] %vm1095, %v989
  %1119 = vst.msk [vmem:[%s4 + $0x5c] sm:$0xf] %vm1095, %v990
  %1120 = vst.msk [vmem:[%s4 + $0x60] sm:$0xf] %vm1095, %v991
  %1121 = vst.msk [vmem:[%s4 + $0x64] sm:$0xf] %vm1095, %v992
  %1122 = vst.msk [vmem:[%s4 + $0x68] sm:$0xf] %vm1095, %v993
  %1123 = vst.msk [vmem:[%s4 + $0x6c] sm:$0xf] %vm1095, %v994
  %1124 = vst.msk [vmem:[%s4 + $0x70] sm:$0xf] %vm1095, %v995
  %1125 = vst.msk [vmem:[%s4 + $0x74] sm:$0xf] %vm1095, %v996
  %1126 = vst.msk [vmem:[%s4 + $0x78] sm:$0xf] %vm1095, %v997
  %1127 = vst.msk [vmem:[%s4 + $0x7c] sm:$0xf] %vm1095, %v998
  %1128 = vst.msk [vmem:[%s4 + $0x80] sm:$0xf] %vm1095, %v999
  %1129 = vst.msk [vmem:[%s4 + $0x84] sm:$0xf] %vm1095, %v1000
  %1130 = vst.msk [vmem:[%s4 + $0x88] sm:$0xf] %vm1095, %v1001
  %1131 = vst.msk [vmem:[%s4 + $0x8c] sm:$0xf] %vm1095, %v1002
  %1132 = vst.msk [vmem:[%s4 + $0x90] sm:$0xf] %vm1095, %v1003
  %1133 = vst.msk [vmem:[%s4 + $0x94] sm:$0xf] %vm1095, %v1004
  %1134 = vst.msk [vmem:[%s4 + $0x98] sm:$0xf] %vm1095, %v1005
  %1135 = vst.msk [vmem:[%s4 + $0x9c] sm:$0xf] %vm1095, %v1006
  %1136 = vst.msk [vmem:[%s4 + $0xa0] sm:$0xf] %vm1095, %v1007
  %1137 = vst.msk [vmem:[%s4 + $0xa4] sm:$0xf] %vm1095, %v1008
  %1138 = vst.msk [vmem:[%s4 + $0xa8] sm:$0xf] %vm1095, %v1009
  %1139 = vst.msk [vmem:[%s4 + $0xac] sm:$0xf] %vm1095, %v1010
  %1140 = vst.msk [vmem:[%s4 + $0xb0] sm:$0xf] %vm1095, %v1011
  %1141 = vst.msk [vmem:[%s4 + $0xb4] sm:$0xf] %vm1095, %v1012
  %1142 = vst.msk [vmem:[%s4 + $0xb8] sm:$0xf] %vm1095, %v1013
  %1143 = vst.msk [vmem:[%s4 + $0xbc] sm:$0xf] %vm1095, %v1014
  %1144 = vst.msk [vmem:[%s4 + $0xc0] sm:$0xf] %vm1095, %v1015
  %1145 = vst.msk [vmem:[%s4 + $0xc4] sm:$0xf] %vm1095, %v1016
  %1146 = vst.msk [vmem:[%s4 + $0xc8] sm:$0xf] %vm1095, %v1017
  %1147 = vst.msk [vmem:[%s4 + $0xcc] sm:$0xf] %vm1095, %v1018
  %1148 = vst.msk [vmem:[%s4 + $0xd0] sm:$0xf] %vm1095, %v1019
  %1149 = vst.msk [vmem:[%s4 + $0xd4] sm:$0xf] %vm1095, %v1020
  %1150 = vst.msk [vmem:[%s4 + $0xd8] sm:$0xf] %vm1095, %v1021
  %1151 = vst.msk [vmem:[%s4 + $0xdc] sm:$0xf] %vm1095, %v1022
  %1152 = vst.msk [vmem:[%s4 + $0xe0] sm:$0xf] %vm1095, %v1023
  %1153 = vst.msk [vmem:[%s4 + $0xe4] sm:$0xf] %vm1095, %v1024
  %1154 = vst.msk [vmem:[%s4 + $0xe8] sm:$0xf] %vm1095, %v1025
  %1155 = vst.msk [vmem:[%s4 + $0xec] sm:$0xf] %vm1095, %v1026
  %1156 = vst.msk [vmem:[%s4 + $0xf0] sm:$0xf] %vm1095, %v1027
  %1157 = vst.msk [vmem:[%s4 + $0xf4] sm:$0xf] %vm1095, %v1028
  %1158 = vst.msk [vmem:[%s4 + $0xf8] sm:$0xf] %vm1095, %v1029
  %1159 = vst.msk [vmem:[%s4 + $0xfc] sm:$0xf] %vm1095, %v1030
  // Predicated region
  $region18: #{tpu_custom_call.1} parent=0 // pred_check
    _
  $region19: #{tpu_custom_call.1} parent=0 // pred_check_branch
    %1161 = sbr.rel (0) target = $region21
  $region20: #{tpu_custom_call.1} parent=0 // pred_region
    _
  $region21: #{tpu_custom_call.1} parent=0 // pred_fallthru
    _
  // Predicated region
  $region22: #{tpu_custom_call.1} parent=0 // pred_check
    _
  $region23: #{tpu_custom_call.1} parent=0 // pred_check_branch
    %1163 = sbr.rel (0) target = $region25
  $region24: #{tpu_custom_call.1} parent=0 // pred_region
    _
  $region25: #{tpu_custom_call.1} parent=0 // pred_fallthru
    _

</llo_original>
